<compile_context>
chip_gen: v5e
topology: v5e:2x2
jax: 0.10.0
libtpu: 0.0.40
codegen_flags: <defaults>
</compile_context>

<pallas_src>
import functools

import jax
import jax.numpy as jnp
from jax import lax
from jax.experimental import pallas as pl
from jax.experimental.pallas import tpu as pltpu

_DILATIONS = (1, 2, 3)


def _conv_bn_relu_layer(a, w_ref, b_ref, mask_ref, mask_base, *, dil, H, W):
    """One [dilated 3x3 conv -> folded BN -> ReLU] on a (cin, H*W) f32 activation value.

    a:        (cin, H*W)      f32 activation (value, lives in vregs).
    w_ref:    (9, C_out, cin) BN-folded weights, tap-major (tap = kh*3 + kw).
    b_ref:    (C_out, 1)      BN-folded bias.
    mask_ref: (27, H*W)       f32 edge-validity masks; rows [mask_base, mask_base+9)
                              belong to this layer's dilation.
    Returns the (C_out, H*W) f32 output activation (value).
    """
    HW = H * W
    acc = None
    for kh in range(3):
        for kw in range(3):
            tap = kh * 3 + kw
            dh = (kh - 1) * dil
            dw = (kw - 1) * dil
            s = dh * W + dw                        # flat (row-major) read offset
            if s == 0:
                tap_a = a                          # centre tap: no shift, mask all-ones
            else:
                row = mask_base + tap
                m = mask_ref[row:row + 1, :]       # (1, HW) combined row+col validity
                # out[p] = a[p + s] for every in-image read; lanes whose read falls
                # outside the image (including roll wrap-around) are zeroed by m.
                tap_a = pltpu.roll(a, (-s) % HW, axis=1) * m
            y = jnp.dot(w_ref[tap], tap_a, preferred_element_type=jnp.float32)
            acc = y if acc is None else acc + y
    return jnp.maximum(acc + b_ref[...], 0.0)      # bias broadcast + ReLU (VPU)


def _dilated_block_kernel(x_ref, mask_ref, w1_ref, b1_ref, w2_ref, b2_ref,
                          w3_ref, b3_ref, o_ref, *, H, W, nb):
    """Fused 3-layer DilatedConv for a block of `nb` batch elements.

    x_ref:    (nb, C_in, H*W)  input block (NCHW flattened over HW)
    mask_ref: (27, H*W)        precomputed edge masks (resident; same block every step)
    w*_ref:   (9, C_out, cin)  folded weights   b*_ref: (C_out, 1) folded bias
    o_ref:    (nb, C_out, H*W) output block (lane-dense stores)
    """
    for i in range(nb):                            # trace-time loop; nb is static
        a = x_ref[i].astype(jnp.float32)           # (C_in, HW)
        a = _conv_bn_relu_layer(a, w1_ref, b1_ref, mask_ref, 0,
                                dil=_DILATIONS[0], H=H, W=W)
        a = _conv_bn_relu_layer(a, w2_ref, b2_ref, mask_ref, 9,
                                dil=_DILATIONS[1], H=H, W=W)
        a = _conv_bn_relu_layer(a, w3_ref, b3_ref, mask_ref, 18,
                                dil=_DILATIONS[2], H=H, W=W)
        o_ref[i] = a.astype(o_ref.dtype)


def _make_edge_masks(H, W, dilations):
    """(len(dilations)*9, H*W) f32: 1 where tap (kh, kw) reads inside the image."""
    hh = jnp.arange(H * W, dtype=jnp.int32) // W
    ww = jnp.arange(H * W, dtype=jnp.int32) % W
    rows = []
    for d in dilations:
        for kh in range(3):
            for kw in range(3):
                dh = (kh - 1) * d
                dw = (kw - 1) * d
                valid = ((hh + dh >= 0) & (hh + dh < H) &
                         (ww + dw >= 0) & (ww + dw < W))
                rows.append(valid.astype(jnp.float32))
    return jnp.stack(rows, axis=0)


def _init_layer(key, cin, cout):
    k = jax.random.split(key, 6)
    w = 0.1 * jax.random.normal(k[0], (cout, cin, 3, 3), jnp.float32)   # OIHW (PyTorch)
    b = 0.1 * jax.random.normal(k[1], (cout,), jnp.float32)
    gamma = 1.0 + 0.1 * jax.random.normal(k[2], (cout,), jnp.float32)
    beta = 0.1 * jax.random.normal(k[3], (cout,), jnp.float32)
    mean = 0.1 * jax.random.normal(k[4], (cout,), jnp.float32)
    var = 0.5 + 0.1 * jnp.abs(jax.random.normal(k[5], (cout,), jnp.float32))
    return dict(w=w, b=b, gamma=gamma, beta=beta, mean=mean, var=var)


def _fold_bn(p, eps=1e-5):
    """Fold inference-mode BatchNorm into the conv: returns OIHW w_eff and bias b_eff."""
    scale = p["gamma"] / jnp.sqrt(p["var"] + eps)          # (C_out,)
    w_eff = p["w"] * scale[:, None, None, None]
    b_eff = (p["b"] - p["mean"]) * scale + p["beta"]
    return w_eff, b_eff


def _layer_mats(p):
    """Tap-major folded weights (9, C_out, cin) and bias (C_out, 1)."""
    w_eff, b_eff = _fold_bn(p)                             # (C_out, cin, 3, 3)
    c_out, cin = w_eff.shape[0], w_eff.shape[1]
    w_taps = jnp.transpose(w_eff, (2, 3, 0, 1)).reshape(9, c_out, cin)
    return w_taps, b_eff.reshape(c_out, 1)


def _pick_images_per_step(N):
    # Amortize the ~0.35us per-grid-step overhead at larger N, but keep the grid length
    # >= 2 so both v7x TensorCores get work ("parallel" batch axis).
    for nb in (8, 4, 2):
        if N % nb == 0 and N // nb >= 2:
            return nb
    return 1


def dilated_conv_forward(x_nchw, params):
    """Full DilatedConv forward. Input/output are NCHW to match the PyTorch module."""
    N, C_in, H, W = x_nchw.shape
    C_out = params[0]["w"].shape[0]
    HW = H * W

    # Static sanity (VMEM OOB is not runtime-checked): the roll+mask construction needs
    # every dilation < H and < W so each in-image tap read is an un-wrapped flat offset.
    assert all(d < H and d < W for d in _DILATIONS), "dilation too large for image"
    assert params[0]["w"].shape[1] == C_in
    assert params[1]["w"].shape[1] == C_out and params[2]["w"].shape[1] == C_out

    nb = _pick_images_per_step(N)
    assert N % nb == 0

    x_flat = x_nchw.reshape(N, C_in, HW)                   # free (row-major) reshape
    masks = _make_edge_masks(H, W, _DILATIONS)             # (27, HW) constant

    (w1, b1), (w2, b2), (w3, b3) = (_layer_mats(p) for p in params)

    kernel = functools.partial(_dilated_block_kernel, H=H, W=W, nb=nb)

    out_flat = pl.pallas_call(
        kernel,
        out_shape=jax.ShapeDtypeStruct((N, C_out, HW), x_nchw.dtype),
        grid=(N // nb,),
        in_specs=[
            pl.BlockSpec((nb, C_in, HW), lambda n: (n, 0, 0)),
            pl.BlockSpec((3 * 9, HW), lambda n: (0, 0)),
            pl.BlockSpec((9, C_out, C_in), lambda n: (0, 0, 0)),
            pl.BlockSpec((C_out, 1), lambda n: (0, 0)),
            pl.BlockSpec((9, C_out, C_out), lambda n: (0, 0, 0)),
            pl.BlockSpec((C_out, 1), lambda n: (0, 0)),
            pl.BlockSpec((9, C_out, C_out), lambda n: (0, 0, 0)),
            pl.BlockSpec((C_out, 1), lambda n: (0, 0)),
        ],
        out_specs=pl.BlockSpec((nb, C_out, HW), lambda n: (n, 0, 0)),
        compiler_params=pltpu.CompilerParams(dimension_semantics=("parallel",)),
    )(x_flat, masks, w1, b1, w2, b2, w3, b3)

    return out_flat.reshape(N, C_out, H, W)


def _reference_forward(x_nchw, params):
    """Plain-JAX reference (lax conv) for a correctness check."""
    x = jnp.transpose(x_nchw, (0, 2, 3, 1))                # NCHW -> NHWC
    for p, dil in zip(params, _DILATIONS):
        w_eff, b_eff = _fold_bn(p)                         # OIHW
        w_hwio = jnp.transpose(w_eff, (2, 3, 1, 0))
        y = lax.conv_general_dilated(
            x, w_hwio, window_strides=(1, 1),
            padding=((dil, dil), (dil, dil)),
            rhs_dilation=(dil, dil),
            dimension_numbers=("NHWC", "HWIO", "NHWC"),
            precision=lax.Precision.HIGHEST)
        x = jnp.maximum(y + b_eff, 0.0)
    return jnp.transpose(x, (0, 3, 1, 2))                  # NHWC -> NCHW


if __name__ == "__main__":
    key = jax.random.PRNGKey(0)
    kx, k1, k2, k3 = jax.random.split(key, 4)

    in_channels, out_channels = 4, 8
    x = jax.random.normal(kx, (2, in_channels, 16, 16), jnp.float32)   # NCHW, like PyTorch

    params = [
        _init_layer(k1, in_channels, out_channels),
        _init_layer(k2, out_channels, out_channels),
        _init_layer(k3, out_channels, out_channels),
    ]

    out = jax.block_until_ready(dilated_conv_forward(x, params))
    ref = jax.block_until_ready(_reference_forward(x, params))

    assert out.shape == (2, out_channels, 16, 16)
    assert jnp.allclose(out, ref, rtol=1e-3, atol=1e-3), "mismatch vs lax reference"

    print("KERNEL_OK")
</pallas_src>

<mosaic_0001>
module attributes {stable_mosaic.version = 11 : i64} {
  func.func @_dilated_block_kernel(%arg0: i32, %arg1: memref<1x4x256xf32, #tpu.memory_space<vmem>>, %arg2: memref<27x256xf32, #tpu.memory_space<vmem>>, %arg3: memref<9x8x4xf32, #tpu.memory_space<vmem>>, %arg4: memref<8x1xf32, #tpu.memory_space<vmem>>, %arg5: memref<9x8x8xf32, #tpu.memory_space<vmem>>, %arg6: memref<8x1xf32, #tpu.memory_space<vmem>>, %arg7: memref<9x8x8xf32, #tpu.memory_space<vmem>>, %arg8: memref<8x1xf32, #tpu.memory_space<vmem>>, %arg9: memref<1x8x256xf32, #tpu.memory_space<vmem>>) attributes {dimension_semantics = [#tpu.dimension_semantics<parallel>], iteration_bounds = array<i64: 2>, scalar_prefetch = 0 : i64, scratch_operands = 0 : i64, tpu.core_type = #tpu.core_type<tc>, window_params = [{transform_indices = @transform_0, window_bounds = array<i64: 1, 4, 256>}, {pipeline_mode = #tpu.pipeline_mode<synchronous>, transform_indices = @transform_1, window_bounds = array<i64: 27, 256>}, {pipeline_mode = #tpu.pipeline_mode<synchronous>, transform_indices = @transform_2, window_bounds = array<i64: 9, 8, 4>}, {pipeline_mode = #tpu.pipeline_mode<synchronous>, transform_indices = @transform_3, window_bounds = array<i64: 8, 1>}, {pipeline_mode = #tpu.pipeline_mode<synchronous>, transform_indices = @transform_4, window_bounds = array<i64: 9, 8, 8>}, {pipeline_mode = #tpu.pipeline_mode<synchronous>, transform_indices = @transform_5, window_bounds = array<i64: 8, 1>}, {pipeline_mode = #tpu.pipeline_mode<synchronous>, transform_indices = @transform_6, window_bounds = array<i64: 9, 8, 8>}, {pipeline_mode = #tpu.pipeline_mode<synchronous>, transform_indices = @transform_7, window_bounds = array<i64: 8, 1>}, {transform_indices = @transform_8, window_bounds = array<i64: 1, 8, 256>}]} {
    %c0 = arith.constant 0 : index
    %c0_0 = arith.constant 0 : index
    %c0_1 = arith.constant 0 : index
    %0 = vector.load %arg1[%c0, %c0_0, %c0_1] : memref<1x4x256xf32, #tpu.memory_space<vmem>>, vector<1x4x256xf32>
    %1 = vector.shape_cast %0 : vector<1x4x256xf32> to vector<4x256xf32>
    %c0_2 = arith.constant 0 : index
    %c0_3 = arith.constant 0 : index
    %2 = vector.load %arg2[%c0_2, %c0_3] : memref<27x256xf32, #tpu.memory_space<vmem>>, vector<1x256xf32>
    %c17_i32 = arith.constant 17 : i32
    %3 = tpu.dynamic_rotate %1 by %c17_i32 dim 1 : vector<4x256xf32>, i32 -> vector<4x256xf32>
    %4 = vector.broadcast %2 : vector<1x256xf32> to vector<4x256xf32>
    %5 = arith.mulf %3, %4 : vector<4x256xf32>
    %c0_4 = arith.constant 0 : index
    %c0_5 = arith.constant 0 : index
    %c0_6 = arith.constant 0 : index
    %6 = vector.load %arg3[%c0_4, %c0_5, %c0_6] : memref<9x8x4xf32, #tpu.memory_space<vmem>>, vector<1x8x4xf32>
    %7 = vector.shape_cast %6 : vector<1x8x4xf32> to vector<8x4xf32>
    %cst = arith.constant dense<0.000000e+00> : vector<8x256xf32>
    %8 = tpu.matmul %7, %5, %cst {dimension_numbers = #tpu.dot_dimension_numbers<[1], [0], [0], [1], [0, 0, 1, 1], [], []>} : vector<8x4xf32>, vector<4x256xf32>, vector<8x256xf32> -> vector<8x256xf32>
    %c1 = arith.constant 1 : index
    %c0_7 = arith.constant 0 : index
    %9 = vector.load %arg2[%c1, %c0_7] : memref<27x256xf32, #tpu.memory_space<vmem>>, vector<1x256xf32>
    %c16_i32 = arith.constant 16 : i32
    %10 = tpu.dynamic_rotate %1 by %c16_i32 dim 1 : vector<4x256xf32>, i32 -> vector<4x256xf32>
    %11 = vector.broadcast %9 : vector<1x256xf32> to vector<4x256xf32>
    %12 = arith.mulf %10, %11 : vector<4x256xf32>
    %c1_8 = arith.constant 1 : index
    %c0_9 = arith.constant 0 : index
    %c0_10 = arith.constant 0 : index
    %13 = vector.load %arg3[%c1_8, %c0_9, %c0_10] : memref<9x8x4xf32, #tpu.memory_space<vmem>>, vector<1x8x4xf32>
    %14 = vector.shape_cast %13 : vector<1x8x4xf32> to vector<8x4xf32>
    %cst_11 = arith.constant dense<0.000000e+00> : vector<8x256xf32>
    %15 = tpu.matmul %14, %12, %cst_11 {dimension_numbers = #tpu.dot_dimension_numbers<[1], [0], [0], [1], [0, 0, 1, 1], [], []>} : vector<8x4xf32>, vector<4x256xf32>, vector<8x256xf32> -> vector<8x256xf32>
    %16 = arith.addf %8, %15 : vector<8x256xf32>
    %c2 = arith.constant 2 : index
    %c0_12 = arith.constant 0 : index
    %17 = vector.load %arg2[%c2, %c0_12] : memref<27x256xf32, #tpu.memory_space<vmem>>, vector<1x256xf32>
    %c15_i32 = arith.constant 15 : i32
    %18 = tpu.dynamic_rotate %1 by %c15_i32 dim 1 : vector<4x256xf32>, i32 -> vector<4x256xf32>
    %19 = vector.broadcast %17 : vector<1x256xf32> to vector<4x256xf32>
    %20 = arith.mulf %18, %19 : vector<4x256xf32>
    %c2_13 = arith.constant 2 : index
    %c0_14 = arith.constant 0 : index
    %c0_15 = arith.constant 0 : index
    %21 = vector.load %arg3[%c2_13, %c0_14, %c0_15] : memref<9x8x4xf32, #tpu.memory_space<vmem>>, vector<1x8x4xf32>
    %22 = vector.shape_cast %21 : vector<1x8x4xf32> to vector<8x4xf32>
    %cst_16 = arith.constant dense<0.000000e+00> : vector<8x256xf32>
    %23 = tpu.matmul %22, %20, %cst_16 {dimension_numbers = #tpu.dot_dimension_numbers<[1], [0], [0], [1], [0, 0, 1, 1], [], []>} : vector<8x4xf32>, vector<4x256xf32>, vector<8x256xf32> -> vector<8x256xf32>
    %24 = arith.addf %16, %23 : vector<8x256xf32>
    %c3 = arith.constant 3 : index
    %c0_17 = arith.constant 0 : index
    %25 = vector.load %arg2[%c3, %c0_17] : memref<27x256xf32, #tpu.memory_space<vmem>>, vector<1x256xf32>
    %c1_i32 = arith.constant 1 : i32
    %26 = tpu.dynamic_rotate %1 by %c1_i32 dim 1 : vector<4x256xf32>, i32 -> vector<4x256xf32>
    %27 = vector.broadcast %25 : vector<1x256xf32> to vector<4x256xf32>
    %28 = arith.mulf %26, %27 : vector<4x256xf32>
    %c3_18 = arith.constant 3 : index
    %c0_19 = arith.constant 0 : index
    %c0_20 = arith.constant 0 : index
    %29 = vector.load %arg3[%c3_18, %c0_19, %c0_20] : memref<9x8x4xf32, #tpu.memory_space<vmem>>, vector<1x8x4xf32>
    %30 = vector.shape_cast %29 : vector<1x8x4xf32> to vector<8x4xf32>
    %cst_21 = arith.constant dense<0.000000e+00> : vector<8x256xf32>
    %31 = tpu.matmul %30, %28, %cst_21 {dimension_numbers = #tpu.dot_dimension_numbers<[1], [0], [0], [1], [0, 0, 1, 1], [], []>} : vector<8x4xf32>, vector<4x256xf32>, vector<8x256xf32> -> vector<8x256xf32>
    %32 = arith.addf %24, %31 : vector<8x256xf32>
    %c4 = arith.constant 4 : index
    %c0_22 = arith.constant 0 : index
    %c0_23 = arith.constant 0 : index
    %33 = vector.load %arg3[%c4, %c0_22, %c0_23] : memref<9x8x4xf32, #tpu.memory_space<vmem>>, vector<1x8x4xf32>
    %34 = vector.shape_cast %33 : vector<1x8x4xf32> to vector<8x4xf32>
    %cst_24 = arith.constant dense<0.000000e+00> : vector<8x256xf32>
    %35 = tpu.matmul %34, %1, %cst_24 {dimension_numbers = #tpu.dot_dimension_numbers<[1], [0], [0], [1], [0, 0, 1, 1], [], []>} : vector<8x4xf32>, vector<4x256xf32>, vector<8x256xf32> -> vector<8x256xf32>
    %36 = arith.addf %32, %35 : vector<8x256xf32>
    %c5 = arith.constant 5 : index
    %c0_25 = arith.constant 0 : index
    %37 = vector.load %arg2[%c5, %c0_25] : memref<27x256xf32, #tpu.memory_space<vmem>>, vector<1x256xf32>
    %c255_i32 = arith.constant 255 : i32
    %38 = tpu.dynamic_rotate %1 by %c255_i32 dim 1 : vector<4x256xf32>, i32 -> vector<4x256xf32>
    %39 = vector.broadcast %37 : vector<1x256xf32> to vector<4x256xf32>
    %40 = arith.mulf %38, %39 : vector<4x256xf32>
    %c5_26 = arith.constant 5 : index
    %c0_27 = arith.constant 0 : index
    %c0_28 = arith.constant 0 : index
    %41 = vector.load %arg3[%c5_26, %c0_27, %c0_28] : memref<9x8x4xf32, #tpu.memory_space<vmem>>, vector<1x8x4xf32>
    %42 = vector.shape_cast %41 : vector<1x8x4xf32> to vector<8x4xf32>
    %cst_29 = arith.constant dense<0.000000e+00> : vector<8x256xf32>
    %43 = tpu.matmul %42, %40, %cst_29 {dimension_numbers = #tpu.dot_dimension_numbers<[1], [0], [0], [1], [0, 0, 1, 1], [], []>} : vector<8x4xf32>, vector<4x256xf32>, vector<8x256xf32> -> vector<8x256xf32>
    %44 = arith.addf %36, %43 : vector<8x256xf32>
    %c6 = arith.constant 6 : index
    %c0_30 = arith.constant 0 : index
    %45 = vector.load %arg2[%c6, %c0_30] : memref<27x256xf32, #tpu.memory_space<vmem>>, vector<1x256xf32>
    %c241_i32 = arith.constant 241 : i32
    %46 = tpu.dynamic_rotate %1 by %c241_i32 dim 1 : vector<4x256xf32>, i32 -> vector<4x256xf32>
    %47 = vector.broadcast %45 : vector<1x256xf32> to vector<4x256xf32>
    %48 = arith.mulf %46, %47 : vector<4x256xf32>
    %c6_31 = arith.constant 6 : index
    %c0_32 = arith.constant 0 : index
    %c0_33 = arith.constant 0 : index
    %49 = vector.load %arg3[%c6_31, %c0_32, %c0_33] : memref<9x8x4xf32, #tpu.memory_space<vmem>>, vector<1x8x4xf32>
    %50 = vector.shape_cast %49 : vector<1x8x4xf32> to vector<8x4xf32>
    %cst_34 = arith.constant dense<0.000000e+00> : vector<8x256xf32>
    %51 = tpu.matmul %50, %48, %cst_34 {dimension_numbers = #tpu.dot_dimension_numbers<[1], [0], [0], [1], [0, 0, 1, 1], [], []>} : vector<8x4xf32>, vector<4x256xf32>, vector<8x256xf32> -> vector<8x256xf32>
    %52 = arith.addf %44, %51 : vector<8x256xf32>
    %c7 = arith.constant 7 : index
    %c0_35 = arith.constant 0 : index
    %53 = vector.load %arg2[%c7, %c0_35] : memref<27x256xf32, #tpu.memory_space<vmem>>, vector<1x256xf32>
    %c240_i32 = arith.constant 240 : i32
    %54 = tpu.dynamic_rotate %1 by %c240_i32 dim 1 : vector<4x256xf32>, i32 -> vector<4x256xf32>
    %55 = vector.broadcast %53 : vector<1x256xf32> to vector<4x256xf32>
    %56 = arith.mulf %54, %55 : vector<4x256xf32>
    %c7_36 = arith.constant 7 : index
    %c0_37 = arith.constant 0 : index
    %c0_38 = arith.constant 0 : index
    %57 = vector.load %arg3[%c7_36, %c0_37, %c0_38] : memref<9x8x4xf32, #tpu.memory_space<vmem>>, vector<1x8x4xf32>
    %58 = vector.shape_cast %57 : vector<1x8x4xf32> to vector<8x4xf32>
    %cst_39 = arith.constant dense<0.000000e+00> : vector<8x256xf32>
    %59 = tpu.matmul %58, %56, %cst_39 {dimension_numbers = #tpu.dot_dimension_numbers<[1], [0], [0], [1], [0, 0, 1, 1], [], []>} : vector<8x4xf32>, vector<4x256xf32>, vector<8x256xf32> -> vector<8x256xf32>
    %60 = arith.addf %52, %59 : vector<8x256xf32>
    %c8 = arith.constant 8 : index
    %c0_40 = arith.constant 0 : index
    %61 = vector.load %arg2[%c8, %c0_40] : memref<27x256xf32, #tpu.memory_space<vmem>>, vector<1x256xf32>
    %c239_i32 = arith.constant 239 : i32
    %62 = tpu.dynamic_rotate %1 by %c239_i32 dim 1 : vector<4x256xf32>, i32 -> vector<4x256xf32>
    %63 = vector.broadcast %61 : vector<1x256xf32> to vector<4x256xf32>
    %64 = arith.mulf %62, %63 : vector<4x256xf32>
    %c8_41 = arith.constant 8 : index
    %c0_42 = arith.constant 0 : index
    %c0_43 = arith.constant 0 : index
    %65 = vector.load %arg3[%c8_41, %c0_42, %c0_43] : memref<9x8x4xf32, #tpu.memory_space<vmem>>, vector<1x8x4xf32>
    %66 = vector.shape_cast %65 : vector<1x8x4xf32> to vector<8x4xf32>
    %cst_44 = arith.constant dense<0.000000e+00> : vector<8x256xf32>
    %67 = tpu.matmul %66, %64, %cst_44 {dimension_numbers = #tpu.dot_dimension_numbers<[1], [0], [0], [1], [0, 0, 1, 1], [], []>} : vector<8x4xf32>, vector<4x256xf32>, vector<8x256xf32> -> vector<8x256xf32>
    %68 = arith.addf %60, %67 : vector<8x256xf32>
    %c0_45 = arith.constant 0 : index
    %c0_46 = arith.constant 0 : index
    %69 = vector.load %arg4[%c0_45, %c0_46] : memref<8x1xf32, #tpu.memory_space<vmem>>, vector<8x1xf32>
    %70 = vector.broadcast %69 : vector<8x1xf32> to vector<8x256xf32>
    %71 = arith.addf %68, %70 : vector<8x256xf32>
    %cst_47 = arith.constant 0.000000e+00 : f32
    %72 = vector.broadcast %cst_47 : f32 to vector<8x256xf32>
    %73 = arith.maximumf %71, %72 : vector<8x256xf32>
    %c9 = arith.constant 9 : index
    %c0_48 = arith.constant 0 : index
    %74 = vector.load %arg2[%c9, %c0_48] : memref<27x256xf32, #tpu.memory_space<vmem>>, vector<1x256xf32>
    %c34_i32 = arith.constant 34 : i32
    %75 = tpu.dynamic_rotate %73 by %c34_i32 dim 1 : vector<8x256xf32>, i32 -> vector<8x256xf32>
    %76 = vector.broadcast %74 : vector<1x256xf32> to vector<8x256xf32>
    %77 = arith.mulf %75, %76 : vector<8x256xf32>
    %c0_49 = arith.constant 0 : index
    %c0_50 = arith.constant 0 : index
    %c0_51 = arith.constant 0 : index
    %78 = vector.load %arg5[%c0_49, %c0_50, %c0_51] : memref<9x8x8xf32, #tpu.memory_space<vmem>>, vector<1x8x8xf32>
    %79 = vector.shape_cast %78 : vector<1x8x8xf32> to vector<8x8xf32>
    %cst_52 = arith.constant dense<0.000000e+00> : vector<8x256xf32>
    %80 = tpu.matmul %79, %77, %cst_52 {dimension_numbers = #tpu.dot_dimension_numbers<[1], [0], [0], [1], [0, 0, 1, 1], [], []>} : vector<8x8xf32>, vector<8x256xf32>, vector<8x256xf32> -> vector<8x256xf32>
    %c10 = arith.constant 10 : index
    %c0_53 = arith.constant 0 : index
    %81 = vector.load %arg2[%c10, %c0_53] : memref<27x256xf32, #tpu.memory_space<vmem>>, vector<1x256xf32>
    %c32_i32 = arith.constant 32 : i32
    %82 = tpu.dynamic_rotate %73 by %c32_i32 dim 1 : vector<8x256xf32>, i32 -> vector<8x256xf32>
    %83 = vector.broadcast %81 : vector<1x256xf32> to vector<8x256xf32>
    %84 = arith.mulf %82, %83 : vector<8x256xf32>
    %c1_54 = arith.constant 1 : index
    %c0_55 = arith.constant 0 : index
    %c0_56 = arith.constant 0 : index
    %85 = vector.load %arg5[%c1_54, %c0_55, %c0_56] : memref<9x8x8xf32, #tpu.memory_space<vmem>>, vector<1x8x8xf32>
    %86 = vector.shape_cast %85 : vector<1x8x8xf32> to vector<8x8xf32>
    %cst_57 = arith.constant dense<0.000000e+00> : vector<8x256xf32>
    %87 = tpu.matmul %86, %84, %cst_57 {dimension_numbers = #tpu.dot_dimension_numbers<[1], [0], [0], [1], [0, 0, 1, 1], [], []>} : vector<8x8xf32>, vector<8x256xf32>, vector<8x256xf32> -> vector<8x256xf32>
    %88 = arith.addf %80, %87 : vector<8x256xf32>
    %c11 = arith.constant 11 : index
    %c0_58 = arith.constant 0 : index
    %89 = vector.load %arg2[%c11, %c0_58] : memref<27x256xf32, #tpu.memory_space<vmem>>, vector<1x256xf32>
    %c30_i32 = arith.constant 30 : i32
    %90 = tpu.dynamic_rotate %73 by %c30_i32 dim 1 : vector<8x256xf32>, i32 -> vector<8x256xf32>
    %91 = vector.broadcast %89 : vector<1x256xf32> to vector<8x256xf32>
    %92 = arith.mulf %90, %91 : vector<8x256xf32>
    %c2_59 = arith.constant 2 : index
    %c0_60 = arith.constant 0 : index
    %c0_61 = arith.constant 0 : index
    %93 = vector.load %arg5[%c2_59, %c0_60, %c0_61] : memref<9x8x8xf32, #tpu.memory_space<vmem>>, vector<1x8x8xf32>
    %94 = vector.shape_cast %93 : vector<1x8x8xf32> to vector<8x8xf32>
    %cst_62 = arith.constant dense<0.000000e+00> : vector<8x256xf32>
    %95 = tpu.matmul %94, %92, %cst_62 {dimension_numbers = #tpu.dot_dimension_numbers<[1], [0], [0], [1], [0, 0, 1, 1], [], []>} : vector<8x8xf32>, vector<8x256xf32>, vector<8x256xf32> -> vector<8x256xf32>
    %96 = arith.addf %88, %95 : vector<8x256xf32>
    %c12 = arith.constant 12 : index
    %c0_63 = arith.constant 0 : index
    %97 = vector.load %arg2[%c12, %c0_63] : memref<27x256xf32, #tpu.memory_space<vmem>>, vector<1x256xf32>
    %c2_i32 = arith.constant 2 : i32
    %98 = tpu.dynamic_rotate %73 by %c2_i32 dim 1 : vector<8x256xf32>, i32 -> vector<8x256xf32>
    %99 = vector.broadcast %97 : vector<1x256xf32> to vector<8x256xf32>
    %100 = arith.mulf %98, %99 : vector<8x256xf32>
    %c3_64 = arith.constant 3 : index
    %c0_65 = arith.constant 0 : index
    %c0_66 = arith.constant 0 : index
    %101 = vector.load %arg5[%c3_64, %c0_65, %c0_66] : memref<9x8x8xf32, #tpu.memory_space<vmem>>, vector<1x8x8xf32>
    %102 = vector.shape_cast %101 : vector<1x8x8xf32> to vector<8x8xf32>
    %cst_67 = arith.constant dense<0.000000e+00> : vector<8x256xf32>
    %103 = tpu.matmul %102, %100, %cst_67 {dimension_numbers = #tpu.dot_dimension_numbers<[1], [0], [0], [1], [0, 0, 1, 1], [], []>} : vector<8x8xf32>, vector<8x256xf32>, vector<8x256xf32> -> vector<8x256xf32>
    %104 = arith.addf %96, %103 : vector<8x256xf32>
    %c4_68 = arith.constant 4 : index
    %c0_69 = arith.constant 0 : index
    %c0_70 = arith.constant 0 : index
    %105 = vector.load %arg5[%c4_68, %c0_69, %c0_70] : memref<9x8x8xf32, #tpu.memory_space<vmem>>, vector<1x8x8xf32>
    %106 = vector.shape_cast %105 : vector<1x8x8xf32> to vector<8x8xf32>
    %cst_71 = arith.constant dense<0.000000e+00> : vector<8x256xf32>
    %107 = tpu.matmul %106, %73, %cst_71 {dimension_numbers = #tpu.dot_dimension_numbers<[1], [0], [0], [1], [0, 0, 1, 1], [], []>} : vector<8x8xf32>, vector<8x256xf32>, vector<8x256xf32> -> vector<8x256xf32>
    %108 = arith.addf %104, %107 : vector<8x256xf32>
    %c14 = arith.constant 14 : index
    %c0_72 = arith.constant 0 : index
    %109 = vector.load %arg2[%c14, %c0_72] : memref<27x256xf32, #tpu.memory_space<vmem>>, vector<1x256xf32>
    %c254_i32 = arith.constant 254 : i32
    %110 = tpu.dynamic_rotate %73 by %c254_i32 dim 1 : vector<8x256xf32>, i32 -> vector<8x256xf32>
    %111 = vector.broadcast %109 : vector<1x256xf32> to vector<8x256xf32>
    %112 = arith.mulf %110, %111 : vector<8x256xf32>
    %c5_73 = arith.constant 5 : index
    %c0_74 = arith.constant 0 : index
    %c0_75 = arith.constant 0 : index
    %113 = vector.load %arg5[%c5_73, %c0_74, %c0_75] : memref<9x8x8xf32, #tpu.memory_space<vmem>>, vector<1x8x8xf32>
    %114 = vector.shape_cast %113 : vector<1x8x8xf32> to vector<8x8xf32>
    %cst_76 = arith.constant dense<0.000000e+00> : vector<8x256xf32>
    %115 = tpu.matmul %114, %112, %cst_76 {dimension_numbers = #tpu.dot_dimension_numbers<[1], [0], [0], [1], [0, 0, 1, 1], [], []>} : vector<8x8xf32>, vector<8x256xf32>, vector<8x256xf32> -> vector<8x256xf32>
    %116 = arith.addf %108, %115 : vector<8x256xf32>
    %c15 = arith.constant 15 : index
    %c0_77 = arith.constant 0 : index
    %117 = vector.load %arg2[%c15, %c0_77] : memref<27x256xf32, #tpu.memory_space<vmem>>, vector<1x256xf32>
    %c226_i32 = arith.constant 226 : i32
    %118 = tpu.dynamic_rotate %73 by %c226_i32 dim 1 : vector<8x256xf32>, i32 -> vector<8x256xf32>
    %119 = vector.broadcast %117 : vector<1x256xf32> to vector<8x256xf32>
    %120 = arith.mulf %118, %119 : vector<8x256xf32>
    %c6_78 = arith.constant 6 : index
    %c0_79 = arith.constant 0 : index
    %c0_80 = arith.constant 0 : index
    %121 = vector.load %arg5[%c6_78, %c0_79, %c0_80] : memref<9x8x8xf32, #tpu.memory_space<vmem>>, vector<1x8x8xf32>
    %122 = vector.shape_cast %121 : vector<1x8x8xf32> to vector<8x8xf32>
    %cst_81 = arith.constant dense<0.000000e+00> : vector<8x256xf32>
    %123 = tpu.matmul %122, %120, %cst_81 {dimension_numbers = #tpu.dot_dimension_numbers<[1], [0], [0], [1], [0, 0, 1, 1], [], []>} : vector<8x8xf32>, vector<8x256xf32>, vector<8x256xf32> -> vector<8x256xf32>
    %124 = arith.addf %116, %123 : vector<8x256xf32>
    %c16 = arith.constant 16 : index
    %c0_82 = arith.constant 0 : index
    %125 = vector.load %arg2[%c16, %c0_82] : memref<27x256xf32, #tpu.memory_space<vmem>>, vector<1x256xf32>
    %c224_i32 = arith.constant 224 : i32
    %126 = tpu.dynamic_rotate %73 by %c224_i32 dim 1 : vector<8x256xf32>, i32 -> vector<8x256xf32>
    %127 = vector.broadcast %125 : vector<1x256xf32> to vector<8x256xf32>
    %128 = arith.mulf %126, %127 : vector<8x256xf32>
    %c7_83 = arith.constant 7 : index
    %c0_84 = arith.constant 0 : index
    %c0_85 = arith.constant 0 : index
    %129 = vector.load %arg5[%c7_83, %c0_84, %c0_85] : memref<9x8x8xf32, #tpu.memory_space<vmem>>, vector<1x8x8xf32>
    %130 = vector.shape_cast %129 : vector<1x8x8xf32> to vector<8x8xf32>
    %cst_86 = arith.constant dense<0.000000e+00> : vector<8x256xf32>
    %131 = tpu.matmul %130, %128, %cst_86 {dimension_numbers = #tpu.dot_dimension_numbers<[1], [0], [0], [1], [0, 0, 1, 1], [], []>} : vector<8x8xf32>, vector<8x256xf32>, vector<8x256xf32> -> vector<8x256xf32>
    %132 = arith.addf %124, %131 : vector<8x256xf32>
    %c17 = arith.constant 17 : index
    %c0_87 = arith.constant 0 : index
    %133 = vector.load %arg2[%c17, %c0_87] : memref<27x256xf32, #tpu.memory_space<vmem>>, vector<1x256xf32>
    %c222_i32 = arith.constant 222 : i32
    %134 = tpu.dynamic_rotate %73 by %c222_i32 dim 1 : vector<8x256xf32>, i32 -> vector<8x256xf32>
    %135 = vector.broadcast %133 : vector<1x256xf32> to vector<8x256xf32>
    %136 = arith.mulf %134, %135 : vector<8x256xf32>
    %c8_88 = arith.constant 8 : index
    %c0_89 = arith.constant 0 : index
    %c0_90 = arith.constant 0 : index
    %137 = vector.load %arg5[%c8_88, %c0_89, %c0_90] : memref<9x8x8xf32, #tpu.memory_space<vmem>>, vector<1x8x8xf32>
    %138 = vector.shape_cast %137 : vector<1x8x8xf32> to vector<8x8xf32>
    %cst_91 = arith.constant dense<0.000000e+00> : vector<8x256xf32>
    %139 = tpu.matmul %138, %136, %cst_91 {dimension_numbers = #tpu.dot_dimension_numbers<[1], [0], [0], [1], [0, 0, 1, 1], [], []>} : vector<8x8xf32>, vector<8x256xf32>, vector<8x256xf32> -> vector<8x256xf32>
    %140 = arith.addf %132, %139 : vector<8x256xf32>
    %c0_92 = arith.constant 0 : index
    %c0_93 = arith.constant 0 : index
    %141 = vector.load %arg6[%c0_92, %c0_93] : memref<8x1xf32, #tpu.memory_space<vmem>>, vector<8x1xf32>
    %142 = vector.broadcast %141 : vector<8x1xf32> to vector<8x256xf32>
    %143 = arith.addf %140, %142 : vector<8x256xf32>
    %cst_94 = arith.constant 0.000000e+00 : f32
    %144 = vector.broadcast %cst_94 : f32 to vector<8x256xf32>
    %145 = arith.maximumf %143, %144 : vector<8x256xf32>
    %c18 = arith.constant 18 : index
    %c0_95 = arith.constant 0 : index
    %146 = vector.load %arg2[%c18, %c0_95] : memref<27x256xf32, #tpu.memory_space<vmem>>, vector<1x256xf32>
    %c51_i32 = arith.constant 51 : i32
    %147 = tpu.dynamic_rotate %145 by %c51_i32 dim 1 : vector<8x256xf32>, i32 -> vector<8x256xf32>
    %148 = vector.broadcast %146 : vector<1x256xf32> to vector<8x256xf32>
    %149 = arith.mulf %147, %148 : vector<8x256xf32>
    %c0_96 = arith.constant 0 : index
    %c0_97 = arith.constant 0 : index
    %c0_98 = arith.constant 0 : index
    %150 = vector.load %arg7[%c0_96, %c0_97, %c0_98] : memref<9x8x8xf32, #tpu.memory_space<vmem>>, vector<1x8x8xf32>
    %151 = vector.shape_cast %150 : vector<1x8x8xf32> to vector<8x8xf32>
    %cst_99 = arith.constant dense<0.000000e+00> : vector<8x256xf32>
    %152 = tpu.matmul %151, %149, %cst_99 {dimension_numbers = #tpu.dot_dimension_numbers<[1], [0], [0], [1], [0, 0, 1, 1], [], []>} : vector<8x8xf32>, vector<8x256xf32>, vector<8x256xf32> -> vector<8x256xf32>
    %c19 = arith.constant 19 : index
    %c0_100 = arith.constant 0 : index
    %153 = vector.load %arg2[%c19, %c0_100] : memref<27x256xf32, #tpu.memory_space<vmem>>, vector<1x256xf32>
    %c48_i32 = arith.constant 48 : i32
    %154 = tpu.dynamic_rotate %145 by %c48_i32 dim 1 : vector<8x256xf32>, i32 -> vector<8x256xf32>
    %155 = vector.broadcast %153 : vector<1x256xf32> to vector<8x256xf32>
    %156 = arith.mulf %154, %155 : vector<8x256xf32>
    %c1_101 = arith.constant 1 : index
    %c0_102 = arith.constant 0 : index
    %c0_103 = arith.constant 0 : index
    %157 = vector.load %arg7[%c1_101, %c0_102, %c0_103] : memref<9x8x8xf32, #tpu.memory_space<vmem>>, vector<1x8x8xf32>
    %158 = vector.shape_cast %157 : vector<1x8x8xf32> to vector<8x8xf32>
    %cst_104 = arith.constant dense<0.000000e+00> : vector<8x256xf32>
    %159 = tpu.matmul %158, %156, %cst_104 {dimension_numbers = #tpu.dot_dimension_numbers<[1], [0], [0], [1], [0, 0, 1, 1], [], []>} : vector<8x8xf32>, vector<8x256xf32>, vector<8x256xf32> -> vector<8x256xf32>
    %160 = arith.addf %152, %159 : vector<8x256xf32>
    %c20 = arith.constant 20 : index
    %c0_105 = arith.constant 0 : index
    %161 = vector.load %arg2[%c20, %c0_105] : memref<27x256xf32, #tpu.memory_space<vmem>>, vector<1x256xf32>
    %c45_i32 = arith.constant 45 : i32
    %162 = tpu.dynamic_rotate %145 by %c45_i32 dim 1 : vector<8x256xf32>, i32 -> vector<8x256xf32>
    %163 = vector.broadcast %161 : vector<1x256xf32> to vector<8x256xf32>
    %164 = arith.mulf %162, %163 : vector<8x256xf32>
    %c2_106 = arith.constant 2 : index
    %c0_107 = arith.constant 0 : index
    %c0_108 = arith.constant 0 : index
    %165 = vector.load %arg7[%c2_106, %c0_107, %c0_108] : memref<9x8x8xf32, #tpu.memory_space<vmem>>, vector<1x8x8xf32>
    %166 = vector.shape_cast %165 : vector<1x8x8xf32> to vector<8x8xf32>
    %cst_109 = arith.constant dense<0.000000e+00> : vector<8x256xf32>
    %167 = tpu.matmul %166, %164, %cst_109 {dimension_numbers = #tpu.dot_dimension_numbers<[1], [0], [0], [1], [0, 0, 1, 1], [], []>} : vector<8x8xf32>, vector<8x256xf32>, vector<8x256xf32> -> vector<8x256xf32>
    %168 = arith.addf %160, %167 : vector<8x256xf32>
    %c21 = arith.constant 21 : index
    %c0_110 = arith.constant 0 : index
    %169 = vector.load %arg2[%c21, %c0_110] : memref<27x256xf32, #tpu.memory_space<vmem>>, vector<1x256xf32>
    %c3_i32 = arith.constant 3 : i32
    %170 = tpu.dynamic_rotate %145 by %c3_i32 dim 1 : vector<8x256xf32>, i32 -> vector<8x256xf32>
    %171 = vector.broadcast %169 : vector<1x256xf32> to vector<8x256xf32>
    %172 = arith.mulf %170, %171 : vector<8x256xf32>
    %c3_111 = arith.constant 3 : index
    %c0_112 = arith.constant 0 : index
    %c0_113 = arith.constant 0 : index
    %173 = vector.load %arg7[%c3_111, %c0_112, %c0_113] : memref<9x8x8xf32, #tpu.memory_space<vmem>>, vector<1x8x8xf32>
    %174 = vector.shape_cast %173 : vector<1x8x8xf32> to vector<8x8xf32>
    %cst_114 = arith.constant dense<0.000000e+00> : vector<8x256xf32>
    %175 = tpu.matmul %174, %172, %cst_114 {dimension_numbers = #tpu.dot_dimension_numbers<[1], [0], [0], [1], [0, 0, 1, 1], [], []>} : vector<8x8xf32>, vector<8x256xf32>, vector<8x256xf32> -> vector<8x256xf32>
    %176 = arith.addf %168, %175 : vector<8x256xf32>
    %c4_115 = arith.constant 4 : index
    %c0_116 = arith.constant 0 : index
    %c0_117 = arith.constant 0 : index
    %177 = vector.load %arg7[%c4_115, %c0_116, %c0_117] : memref<9x8x8xf32, #tpu.memory_space<vmem>>, vector<1x8x8xf32>
    %178 = vector.shape_cast %177 : vector<1x8x8xf32> to vector<8x8xf32>
    %cst_118 = arith.constant dense<0.000000e+00> : vector<8x256xf32>
    %179 = tpu.matmul %178, %145, %cst_118 {dimension_numbers = #tpu.dot_dimension_numbers<[1], [0], [0], [1], [0, 0, 1, 1], [], []>} : vector<8x8xf32>, vector<8x256xf32>, vector<8x256xf32> -> vector<8x256xf32>
    %180 = arith.addf %176, %179 : vector<8x256xf32>
    %c23 = arith.constant 23 : index
    %c0_119 = arith.constant 0 : index
    %181 = vector.load %arg2[%c23, %c0_119] : memref<27x256xf32, #tpu.memory_space<vmem>>, vector<1x256xf32>
    %c253_i32 = arith.constant 253 : i32
    %182 = tpu.dynamic_rotate %145 by %c253_i32 dim 1 : vector<8x256xf32>, i32 -> vector<8x256xf32>
    %183 = vector.broadcast %181 : vector<1x256xf32> to vector<8x256xf32>
    %184 = arith.mulf %182, %183 : vector<8x256xf32>
    %c5_120 = arith.constant 5 : index
    %c0_121 = arith.constant 0 : index
    %c0_122 = arith.constant 0 : index
    %185 = vector.load %arg7[%c5_120, %c0_121, %c0_122] : memref<9x8x8xf32, #tpu.memory_space<vmem>>, vector<1x8x8xf32>
    %186 = vector.shape_cast %185 : vector<1x8x8xf32> to vector<8x8xf32>
    %cst_123 = arith.constant dense<0.000000e+00> : vector<8x256xf32>
    %187 = tpu.matmul %186, %184, %cst_123 {dimension_numbers = #tpu.dot_dimension_numbers<[1], [0], [0], [1], [0, 0, 1, 1], [], []>} : vector<8x8xf32>, vector<8x256xf32>, vector<8x256xf32> -> vector<8x256xf32>
    %188 = arith.addf %180, %187 : vector<8x256xf32>
    %c24 = arith.constant 24 : index
    %c0_124 = arith.constant 0 : index
    %189 = vector.load %arg2[%c24, %c0_124] : memref<27x256xf32, #tpu.memory_space<vmem>>, vector<1x256xf32>
    %c211_i32 = arith.constant 211 : i32
    %190 = tpu.dynamic_rotate %145 by %c211_i32 dim 1 : vector<8x256xf32>, i32 -> vector<8x256xf32>
    %191 = vector.broadcast %189 : vector<1x256xf32> to vector<8x256xf32>
    %192 = arith.mulf %190, %191 : vector<8x256xf32>
    %c6_125 = arith.constant 6 : index
    %c0_126 = arith.constant 0 : index
    %c0_127 = arith.constant 0 : index
    %193 = vector.load %arg7[%c6_125, %c0_126, %c0_127] : memref<9x8x8xf32, #tpu.memory_space<vmem>>, vector<1x8x8xf32>
    %194 = vector.shape_cast %193 : vector<1x8x8xf32> to vector<8x8xf32>
    %cst_128 = arith.constant dense<0.000000e+00> : vector<8x256xf32>
    %195 = tpu.matmul %194, %192, %cst_128 {dimension_numbers = #tpu.dot_dimension_numbers<[1], [0], [0], [1], [0, 0, 1, 1], [], []>} : vector<8x8xf32>, vector<8x256xf32>, vector<8x256xf32> -> vector<8x256xf32>
    %196 = arith.addf %188, %195 : vector<8x256xf32>
    %c25 = arith.constant 25 : index
    %c0_129 = arith.constant 0 : index
    %197 = vector.load %arg2[%c25, %c0_129] : memref<27x256xf32, #tpu.memory_space<vmem>>, vector<1x256xf32>
    %c208_i32 = arith.constant 208 : i32
    %198 = tpu.dynamic_rotate %145 by %c208_i32 dim 1 : vector<8x256xf32>, i32 -> vector<8x256xf32>
    %199 = vector.broadcast %197 : vector<1x256xf32> to vector<8x256xf32>
    %200 = arith.mulf %198, %199 : vector<8x256xf32>
    %c7_130 = arith.constant 7 : index
    %c0_131 = arith.constant 0 : index
    %c0_132 = arith.constant 0 : index
    %201 = vector.load %arg7[%c7_130, %c0_131, %c0_132] : memref<9x8x8xf32, #tpu.memory_space<vmem>>, vector<1x8x8xf32>
    %202 = vector.shape_cast %201 : vector<1x8x8xf32> to vector<8x8xf32>
    %cst_133 = arith.constant dense<0.000000e+00> : vector<8x256xf32>
    %203 = tpu.matmul %202, %200, %cst_133 {dimension_numbers = #tpu.dot_dimension_numbers<[1], [0], [0], [1], [0, 0, 1, 1], [], []>} : vector<8x8xf32>, vector<8x256xf32>, vector<8x256xf32> -> vector<8x256xf32>
    %204 = arith.addf %196, %203 : vector<8x256xf32>
    %c26 = arith.constant 26 : index
    %c0_134 = arith.constant 0 : index
    %205 = vector.load %arg2[%c26, %c0_134] : memref<27x256xf32, #tpu.memory_space<vmem>>, vector<1x256xf32>
    %c205_i32 = arith.constant 205 : i32
    %206 = tpu.dynamic_rotate %145 by %c205_i32 dim 1 : vector<8x256xf32>, i32 -> vector<8x256xf32>
    %207 = vector.broadcast %205 : vector<1x256xf32> to vector<8x256xf32>
    %208 = arith.mulf %206, %207 : vector<8x256xf32>
    %c8_135 = arith.constant 8 : index
    %c0_136 = arith.constant 0 : index
    %c0_137 = arith.constant 0 : index
    %209 = vector.load %arg7[%c8_135, %c0_136, %c0_137] : memref<9x8x8xf32, #tpu.memory_space<vmem>>, vector<1x8x8xf32>
    %210 = vector.shape_cast %209 : vector<1x8x8xf32> to vector<8x8xf32>
    %cst_138 = arith.constant dense<0.000000e+00> : vector<8x256xf32>
    %211 = tpu.matmul %210, %208, %cst_138 {dimension_numbers = #tpu.dot_dimension_numbers<[1], [0], [0], [1], [0, 0, 1, 1], [], []>} : vector<8x8xf32>, vector<8x256xf32>, vector<8x256xf32> -> vector<8x256xf32>
    %212 = arith.addf %204, %211 : vector<8x256xf32>
    %c0_139 = arith.constant 0 : index
    %c0_140 = arith.constant 0 : index
    %213 = vector.load %arg8[%c0_139, %c0_140] : memref<8x1xf32, #tpu.memory_space<vmem>>, vector<8x1xf32>
    %214 = vector.broadcast %213 : vector<8x1xf32> to vector<8x256xf32>
    %215 = arith.addf %212, %214 : vector<8x256xf32>
    %cst_141 = arith.constant 0.000000e+00 : f32
    %216 = vector.broadcast %cst_141 : f32 to vector<8x256xf32>
    %217 = arith.maximumf %215, %216 : vector<8x256xf32>
    %c0_142 = arith.constant 0 : index
    %c0_143 = arith.constant 0 : index
    %c0_144 = arith.constant 0 : index
    %218 = vector.load %arg9[%c0_142, %c0_143, %c0_144] : memref<1x8x256xf32, #tpu.memory_space<vmem>>, vector<1x8x256xf32>
    %219 = vector.shape_cast %218 : vector<1x8x256xf32> to vector<8x256xf32>
    %220 = vector.shape_cast %217 : vector<8x256xf32> to vector<1x8x256xf32>
    tpu.vector_store %arg9[%c0_142, %c0_143, %c0_144], %220 {strides = array<i32>} : memref<1x8x256xf32, #tpu.memory_space<vmem>>, vector<1x8x256xf32>,
    return
  }
  func.func @transform_0(%arg0: i32) -> (i32, i32, i32) {
    %c0_i32 = arith.constant 0 : i32
    %c0_i32_0 = arith.constant 0 : i32
    %c0_i32_1 = arith.constant 0 : i32
    return %arg0, %c0_i32, %c0_i32_0 : i32, i32, i32
  }
  func.func @transform_1(%arg0: i32) -> (i32, i32) {
    %c0_i32 = arith.constant 0 : i32
    %c0_i32_0 = arith.constant 0 : i32
    %c0_i32_1 = arith.constant 0 : i32
    return %c0_i32, %c0_i32_0 : i32, i32
  }
  func.func @transform_2(%arg0: i32) -> (i32, i32, i32) {
    %c0_i32 = arith.constant 0 : i32
    %c0_i32_0 = arith.constant 0 : i32
    %c0_i32_1 = arith.constant 0 : i32
    %c0_i32_2 = arith.constant 0 : i32
    return %c0_i32, %c0_i32_0, %c0_i32_1 : i32, i32, i32
  }
  func.func @transform_3(%arg0: i32) -> (i32, i32) {
    %c0_i32 = arith.constant 0 : i32
    %c0_i32_0 = arith.constant 0 : i32
    %c0_i32_1 = arith.constant 0 : i32
    return %c0_i32, %c0_i32_0 : i32, i32
  }
  func.func @transform_4(%arg0: i32) -> (i32, i32, i32) {
    %c0_i32 = arith.constant 0 : i32
    %c0_i32_0 = arith.constant 0 : i32
    %c0_i32_1 = arith.constant 0 : i32
    %c0_i32_2 = arith.constant 0 : i32
    return %c0_i32, %c0_i32_0, %c0_i32_1 : i32, i32, i32
  }
  func.func @transform_5(%arg0: i32) -> (i32, i32) {
    %c0_i32 = arith.constant 0 : i32
    %c0_i32_0 = arith.constant 0 : i32
    %c0_i32_1 = arith.constant 0 : i32
    return %c0_i32, %c0_i32_0 : i32, i32
  }
  func.func @transform_6(%arg0: i32) -> (i32, i32, i32) {
    %c0_i32 = arith.constant 0 : i32
    %c0_i32_0 = arith.constant 0 : i32
    %c0_i32_1 = arith.constant 0 : i32
    %c0_i32_2 = arith.constant 0 : i32
    return %c0_i32, %c0_i32_0, %c0_i32_1 : i32, i32, i32
  }
  func.func @transform_7(%arg0: i32) -> (i32, i32) {
    %c0_i32 = arith.constant 0 : i32
    %c0_i32_0 = arith.constant 0 : i32
    %c0_i32_1 = arith.constant 0 : i32
    return %c0_i32, %c0_i32_0 : i32, i32
  }
  func.func @transform_8(%arg0: i32) -> (i32, i32, i32) {
    %c0_i32 = arith.constant 0 : i32
    %c0_i32_0 = arith.constant 0 : i32
    %c0_i32_1 = arith.constant 0 : i32
    return %arg0, %c0_i32, %c0_i32_0 : i32, i32, i32
  }
}

</mosaic_0001>

<llo_original>
// kernel: tpu_custom_call.1
$region0: #{tpu_custom_call.1}
  #allocation0 [shape = 'u32[]', space=smem, size = 0x4, offset = 0x4, fixed_abs, tag = 'smem constant byte address 0x4 - core index']
  #allocation1 [shape = 'u32[72,128]{1,0:T(1,128)}', space=vmem, size = 0x9000, scoped, tag = 'internal scratch']
  %s0 = inlined_call_operand.vmem [shape: f32[2,4,256], index: 0, kind: input, shape index: {}]
  %s1 = inlined_call_operand.vmem [shape: f32[27,256], index: 1, kind: input, shape index: {}]
  %s2 = inlined_call_operand.vmem [shape: f32[9,8,4], index: 2, kind: input, shape index: {}]
  %s3 = inlined_call_operand.vmem [shape: f32[8,1], index: 3, kind: input, shape index: {}]
  %s4 = inlined_call_operand.vmem [shape: f32[9,8,8], index: 4, kind: input, shape index: {}]
  %s5 = inlined_call_operand.vmem [shape: f32[8,1], index: 5, kind: input, shape index: {}]
  %s6 = inlined_call_operand.vmem [shape: f32[9,8,8], index: 6, kind: input, shape index: {}]
  %s7 = inlined_call_operand.vmem [shape: f32[8,1], index: 7, kind: input, shape index: {}]
  %s8 = inlined_call_operand.hbm [shape: f32[2,8,256], index: 8, kind: output, shape index: {}]
  %s9 = sld [smem:[#allocation0]]
  $region65: #{tpu_custom_call.1} parent=0
    _
  %s11 = ssub.s32 1, %s9
  %s12 = scalar_select 0, %s11, %s9
  $region1: #{tpu_custom_call.1} parent=0
    #allocation2 [shape = 'u8[16384]{0}', space=vmem, size = 0x4000, scoped, tag = 'output window, operand 0']
    #allocation3 [shape = 's32[2]{0}', space=sflag, size = 0x8, scoped, tag = 'scoped memory for tpu_custom_call.1']
    %13 = vsyncpa [#allocation3], 0
    %s14 = scalar_lea.sflag [#allocation3], 1
    %15 = vsyncpa %s14, 0
    loop: start=0, step=1, limit=4
    $region2: #{tpu_custom_call.1} parent=1 // loop_pre_header
      _
    $region3: #{tpu_custom_call.1} parent=1 // loop_header
      %s17 = sphi 0, %s21
      %p18 = scmp.ge.s32.totalorder %s17, 4
      %s27 = sphi 0, %s29
      %s30 = sphi 0, %s27
      %s31 = sphi 0, %s30
      %s47 = sphi 0, %s31
      %s51 = sphi 0, %s51
      %s53 = sphi 0, %s51
      %s54 = sphi 0, %s53
      %s68 = sphi 0, %s54
      %s72 = sphi 0, %s72
      %s74 = sphi 0, %s72
      %s75 = sphi 0, %s74
      %s89 = sphi 0, %s75
      %s93 = sphi 0, %s93
      %s95 = sphi 0, %s93
      %s96 = sphi 0, %s95
      %s110 = sphi 0, %s96
      %s114 = sphi 0, %s114
      %s116 = sphi 0, %s114
      %s117 = sphi 0, %s116
      %s131 = sphi 0, %s117
      %s135 = sphi 0, %s135
      %s137 = sphi 0, %s135
      %s138 = sphi 0, %s137
      %s152 = sphi 0, %s138
      %s156 = sphi 0, %s156
      %s158 = sphi 0, %s156
      %s159 = sphi 0, %s158
      %s173 = sphi 0, %s159
      %s177 = sphi 0, %s177
      %s179 = sphi 0, %s177
      %s180 = sphi 0, %s179
      %s194 = sphi 0, %s180
      %s200 = sphi 0, %s202
      %s203 = sphi 0, %s200
      %s204 = sphi 0, %s203
      %s220 = sphi 0, %s204
    $region4: #{tpu_custom_call.1} parent=1 // loop_header_branch
      %20 = sbr.rel (%p18) target = $region8
    $region5: #{tpu_custom_call.1} parent=1 // loop_body
      %s22 = ssub.s32 %s17, 1
      %s23 = ssub.s32 %s17, 2
      %s24 = sadd.s32 %s17, 1
      %s25 = ssub.s32 %s17, %s24
      %p26 = scmp.eq.s32.totalorder %s25, 0
      %s28 = sadd.s32 %s27, 1
      %s29 = scalar_select %p26, %s27, %s28
      %p32 = pneg %p26
      %p33 = scmp.eq.s32.totalorder %s17, 1
      %p34 = por %p32, %p33
      %p35 = scmp.ne.s32.totalorder %s27, %s30
      %p36 = scmp.eq.s32.totalorder %s17, 0
      %p37 = por %p35, %p36
      %p38 = scmp.ne.s32.totalorder %s27, %s30
      %p39 = scmp.eq.s32.totalorder %s22, 1
      %p40 = por %p38, %p39
      %p41 = scmp.ne.s32.totalorder %s30, %s31
      %p42 = scmp.eq.s32.totalorder %s22, 0
      %p43 = por %p41, %p42
      %p44 = scmp.ne.s32.totalorder %s30, %s31
      %p45 = scmp.eq.s32.totalorder %s23, 1
      %p46 = por %p44, %p45
      %p48 = scmp.ne.s32.totalorder %s31, %s47
      %p49 = scmp.eq.s32.totalorder %s23, 0
      %p50 = por %p48, %p49
      %s52 = sadd.s32 %s51, 1
      %p55 = scmp.eq.s32.totalorder %s17, 1
      %p56 = scmp.ne.s32.totalorder %s51, %s53
      %p57 = scmp.eq.s32.totalorder %s17, 0
      %p58 = por %p56, %p57
      %p59 = scmp.ne.s32.totalorder %s51, %s53
      %p60 = scmp.eq.s32.totalorder %s22, 1
      %p61 = por %p59, %p60
      %p62 = scmp.ne.s32.totalorder %s53, %s54
      %p63 = scmp.eq.s32.totalorder %s22, 0
      %p64 = por %p62, %p63
      %p65 = scmp.ne.s32.totalorder %s53, %s54
      %p66 = scmp.eq.s32.totalorder %s23, 1
      %p67 = por %p65, %p66
      %p69 = scmp.ne.s32.totalorder %s54, %s68
      %p70 = scmp.eq.s32.totalorder %s23, 0
      %p71 = por %p69, %p70
      %s73 = sadd.s32 %s72, 1
      %p76 = scmp.eq.s32.totalorder %s17, 1
      %p77 = scmp.ne.s32.totalorder %s72, %s74
      %p78 = scmp.eq.s32.totalorder %s17, 0
      %p79 = por %p77, %p78
      %p80 = scmp.ne.s32.totalorder %s72, %s74
      %p81 = scmp.eq.s32.totalorder %s22, 1
      %p82 = por %p80, %p81
      %p83 = scmp.ne.s32.totalorder %s74, %s75
      %p84 = scmp.eq.s32.totalorder %s22, 0
      %p85 = por %p83, %p84
      %p86 = scmp.ne.s32.totalorder %s74, %s75
      %p87 = scmp.eq.s32.totalorder %s23, 1
      %p88 = por %p86, %p87
      %p90 = scmp.ne.s32.totalorder %s75, %s89
      %p91 = scmp.eq.s32.totalorder %s23, 0
      %p92 = por %p90, %p91
      %s94 = sadd.s32 %s93, 1
      %p97 = scmp.eq.s32.totalorder %s17, 1
      %p98 = scmp.ne.s32.totalorder %s93, %s95
      %p99 = scmp.eq.s32.totalorder %s17, 0
      %p100 = por %p98, %p99
      %p101 = scmp.ne.s32.totalorder %s93, %s95
      %p102 = scmp.eq.s32.totalorder %s22, 1
      %p103 = por %p101, %p102
      %p104 = scmp.ne.s32.totalorder %s95, %s96
      %p105 = scmp.eq.s32.totalorder %s22, 0
      %p106 = por %p104, %p105
      %p107 = scmp.ne.s32.totalorder %s95, %s96
      %p108 = scmp.eq.s32.totalorder %s23, 1
      %p109 = por %p107, %p108
      %p111 = scmp.ne.s32.totalorder %s96, %s110
      %p112 = scmp.eq.s32.totalorder %s23, 0
      %p113 = por %p111, %p112
      %s115 = sadd.s32 %s114, 1
      %p118 = scmp.eq.s32.totalorder %s17, 1
      %p119 = scmp.ne.s32.totalorder %s114, %s116
      %p120 = scmp.eq.s32.totalorder %s17, 0
      %p121 = por %p119, %p120
      %p122 = scmp.ne.s32.totalorder %s114, %s116
      %p123 = scmp.eq.s32.totalorder %s22, 1
      %p124 = por %p122, %p123
      %p125 = scmp.ne.s32.totalorder %s116, %s117
      %p126 = scmp.eq.s32.totalorder %s22, 0
      %p127 = por %p125, %p126
      %p128 = scmp.ne.s32.totalorder %s116, %s117
      %p129 = scmp.eq.s32.totalorder %s23, 1
      %p130 = por %p128, %p129
      %p132 = scmp.ne.s32.totalorder %s117, %s131
      %p133 = scmp.eq.s32.totalorder %s23, 0
      %p134 = por %p132, %p133
      %s136 = sadd.s32 %s135, 1
      %p139 = scmp.eq.s32.totalorder %s17, 1
      %p140 = scmp.ne.s32.totalorder %s135, %s137
      %p141 = scmp.eq.s32.totalorder %s17, 0
      %p142 = por %p140, %p141
      %p143 = scmp.ne.s32.totalorder %s135, %s137
      %p144 = scmp.eq.s32.totalorder %s22, 1
      %p145 = por %p143, %p144
      %p146 = scmp.ne.s32.totalorder %s137, %s138
      %p147 = scmp.eq.s32.totalorder %s22, 0
      %p148 = por %p146, %p147
      %p149 = scmp.ne.s32.totalorder %s137, %s138
      %p150 = scmp.eq.s32.totalorder %s23, 1
      %p151 = por %p149, %p150
      %p153 = scmp.ne.s32.totalorder %s138, %s152
      %p154 = scmp.eq.s32.totalorder %s23, 0
      %p155 = por %p153, %p154
      %s157 = sadd.s32 %s156, 1
      %p160 = scmp.eq.s32.totalorder %s17, 1
      %p161 = scmp.ne.s32.totalorder %s156, %s158
      %p162 = scmp.eq.s32.totalorder %s17, 0
      %p163 = por %p161, %p162
      %p164 = scmp.ne.s32.totalorder %s156, %s158
      %p165 = scmp.eq.s32.totalorder %s22, 1
      %p166 = por %p164, %p165
      %p167 = scmp.ne.s32.totalorder %s158, %s159
      %p168 = scmp.eq.s32.totalorder %s22, 0
      %p169 = por %p167, %p168
      %p170 = scmp.ne.s32.totalorder %s158, %s159
      %p171 = scmp.eq.s32.totalorder %s23, 1
      %p172 = por %p170, %p171
      %p174 = scmp.ne.s32.totalorder %s159, %s173
      %p175 = scmp.eq.s32.totalorder %s23, 0
      %p176 = por %p174, %p175
      %s178 = sadd.s32 %s177, 1
      %p181 = scmp.eq.s32.totalorder %s17, 1
      %p182 = scmp.ne.s32.totalorder %s177, %s179
      %p183 = scmp.eq.s32.totalorder %s17, 0
      %p184 = por %p182, %p183
      %p185 = scmp.ne.s32.totalorder %s177, %s179
      %p186 = scmp.eq.s32.totalorder %s22, 1
      %p187 = por %p185, %p186
      %p188 = scmp.ne.s32.totalorder %s179, %s180
      %p189 = scmp.eq.s32.totalorder %s22, 0
      %p190 = por %p188, %p189
      %p191 = scmp.ne.s32.totalorder %s179, %s180
      %p192 = scmp.eq.s32.totalorder %s23, 1
      %p193 = por %p191, %p192
      %p195 = scmp.ne.s32.totalorder %s180, %s194
      %p196 = scmp.eq.s32.totalorder %s23, 0
      %p197 = por %p195, %p196
      %s198 = ssub.s32 %s17, %s24
      %p199 = scmp.eq.s32.totalorder %s198, 0
      %s201 = sadd.s32 %s200, 1
      %s202 = scalar_select %p199, %s200, %s201
      %p205 = pneg %p199
      %p206 = scmp.eq.s32.totalorder %s17, 1
      %p207 = por %p205, %p206
      %p208 = scmp.ne.s32.totalorder %s200, %s203
      %p209 = scmp.eq.s32.totalorder %s17, 0
      %p210 = por %p208, %p209
      %p211 = scmp.ne.s32.totalorder %s200, %s203
      %p212 = scmp.eq.s32.totalorder %s22, 1
      %p213 = por %p211, %p212
      %p214 = scmp.ne.s32.totalorder %s203, %s204
      %p215 = scmp.eq.s32.totalorder %s22, 0
      %p216 = por %p214, %p215
      %p217 = scmp.ne.s32.totalorder %s203, %s204
      %p218 = scmp.eq.s32.totalorder %s23, 1
      %p219 = por %p217, %p218
      %p221 = scmp.ne.s32.totalorder %s204, %s220
      %p222 = scmp.eq.s32.totalorder %s23, 0
      %p223 = por %p221, %p222
      %p224 = scmp.le.s32.totalorder 1, %s17
      %p225 = scmp.lt.s32.totalorder %s17, 3
      %p226 = pnand %p224, %p225
      %p227 = pneg %p226
      // Predicated region
      $region9: #{tpu_custom_call.1} parent=5 // pred_check
        _
      $region10: #{tpu_custom_call.1} parent=5 // pred_check_branch
        %229 = sbr.rel (%p226) target = $region12
      $region11: #{tpu_custom_call.1} parent=5 // pred_region
        %s230 = ssub.s32 %s17, 1
        // Predicated region
        $region13: #{tpu_custom_call.1} parent=11 // pred_check
          %p231 = pneg %p64
        $region14: #{tpu_custom_call.1} parent=11 // pred_check_branch
          %233 = sbr.rel (%p231) target = $region16
        $region15: #{tpu_custom_call.1} parent=11 // pred_region
          _
        $region16: #{tpu_custom_call.1} parent=11 // pred_fallthru
          _
        // Predicated region
        $region17: #{tpu_custom_call.1} parent=11 // pred_check
          %p234 = pneg %p85
        $region18: #{tpu_custom_call.1} parent=11 // pred_check_branch
          %236 = sbr.rel (%p234) target = $region20
        $region19: #{tpu_custom_call.1} parent=11 // pred_region
          _
        $region20: #{tpu_custom_call.1} parent=11 // pred_fallthru
          _
        // Predicated region
        $region21: #{tpu_custom_call.1} parent=11 // pred_check
          %p237 = pneg %p106
        $region22: #{tpu_custom_call.1} parent=11 // pred_check_branch
          %239 = sbr.rel (%p237) target = $region24
        $region23: #{tpu_custom_call.1} parent=11 // pred_region
          _
        $region24: #{tpu_custom_call.1} parent=11 // pred_fallthru
          _
        // Predicated region
        $region25: #{tpu_custom_call.1} parent=11 // pred_check
          %p240 = pneg %p127
        $region26: #{tpu_custom_call.1} parent=11 // pred_check_branch
          %242 = sbr.rel (%p240) target = $region28
        $region27: #{tpu_custom_call.1} parent=11 // pred_region
          _
        $region28: #{tpu_custom_call.1} parent=11 // pred_fallthru
          _
        // Predicated region
        $region29: #{tpu_custom_call.1} parent=11 // pred_check
          %p243 = pneg %p148
        $region30: #{tpu_custom_call.1} parent=11 // pred_check_branch
          %245 = sbr.rel (%p243) target = $region32
        $region31: #{tpu_custom_call.1} parent=11 // pred_region
          _
        $region32: #{tpu_custom_call.1} parent=11 // pred_fallthru
          _
        // Predicated region
        $region33: #{tpu_custom_call.1} parent=11 // pred_check
          %p246 = pneg %p169
        $region34: #{tpu_custom_call.1} parent=11 // pred_check_branch
          %248 = sbr.rel (%p246) target = $region36
        $region35: #{tpu_custom_call.1} parent=11 // pred_region
          _
        $region36: #{tpu_custom_call.1} parent=11 // pred_fallthru
          _
        // Predicated region
        $region37: #{tpu_custom_call.1} parent=11 // pred_check
          %p249 = pneg %p190
        $region38: #{tpu_custom_call.1} parent=11 // pred_check_branch
          %251 = sbr.rel (%p249) target = $region40
        $region39: #{tpu_custom_call.1} parent=11 // pred_region
          _
        $region40: #{tpu_custom_call.1} parent=11 // pred_fallthru
          _
      $region12: #{tpu_custom_call.1} parent=5 // pred_fallthru
        _
      %p252 = scmp.lt.s32.totalorder %s17, 2
      // Predicated region
      $region41: #{tpu_custom_call.1} parent=5 // pred_check
        %p253 = pneg %p252
      $region42: #{tpu_custom_call.1} parent=5 // pred_check_branch
        %255 = sbr.rel (%p253) target = $region44
      $region43: #{tpu_custom_call.1} parent=5 // pred_region
        // Predicated region
        $region45: #{tpu_custom_call.1} parent=43 // pred_check
          %p256 = pneg %p37
        $region46: #{tpu_custom_call.1} parent=43 // pred_check_branch
          %258 = sbr.rel (%p256) target = $region48
        $region47: #{tpu_custom_call.1} parent=43 // pred_region
          %p259 = scmp.lt.s32.totalorder %s17, 1
          %s260 = scalar_select %p259, %s17, 1
          %s261 = smul.addr %s260, 2
          %s262 = smul.addr %s261, 4
          %s263 = scalar_lea.vmem %s0, %s262
        $region48: #{tpu_custom_call.1} parent=43 // pred_fallthru
          _
      $region44: #{tpu_custom_call.1} parent=5 // pred_fallthru
        _
      %p264 = scmp.le.s32.totalorder 1, %s17
      %p265 = scmp.lt.s32.totalorder %s17, 3
      %p266 = pnand %p264, %p265
      %p267 = pneg %p266
      // Predicated region
      $region49: #{tpu_custom_call.1} parent=5 // pred_check
        _
      $region50: #{tpu_custom_call.1} parent=5 // pred_check_branch
        %269 = sbr.rel (%p266) target = $region52
      $region51: #{tpu_custom_call.1} parent=5 // pred_region
        %s270 = ssub.s32 %s17, 1
        %p271 = scmp.lt.s32.totalorder %s22, 1
        %s272 = scalar_select %p271, %s22, 1
        %s273 = smul.addr %s272, 2
        %s274 = smul.addr %s273, 4
        %s275 = scalar_lea.vmem %s0, %s274
        %p276 = pneg %p43
        %p277 = pneg %p40
        %p278 = pneg %p64
        %p279 = pneg %p61
        %p280 = pneg %p85
        %p281 = pneg %p82
        %p282 = pneg %p106
        %p283 = pneg %p103
        %p284 = pneg %p127
        %p285 = pneg %p124
        %p286 = pneg %p148
        %p287 = pneg %p145
        %p288 = pneg %p169
        %p289 = pneg %p166
        %p290 = pneg %p190
        %p291 = pneg %p187
        %p292 = pneg %p216
        %p293 = pneg %p213
        %s294 = sand.u32 %s203, 1
        %s295 = scalar_lea.sflag [#allocation3], %s294
        %s296 = sand.u32 %s203, 1
        %s297 = smul.addr %s296, 16
        %s298 = scalar_lea.vmem [#allocation2], %s297
        %p299 = scmp.lt.s32.totalorder %s22, 1
        %s300 = scalar_select %p299, %s22, 1
        %s301 = smul.addr %s300, 2
        %s302 = smul.addr %s301, 4
        %s303 = scalar_lea.vmem %s0, %s302
        %v304 = vld [vmem:[%s303] sm:$0xff]
        %v305 = vld [vmem:[%s1] ss:$8 sm:$0x3]
        %307 = vst [vmem:[#allocation1] ss:$2 sm:$0xff] %v304
        %v308 = vld.sshfl [vmem:[#allocation1] sm:$0xff pattern:$0x75316420]
        %v309 = vld.sshfl [vmem:[#allocation1 + $0x8] sm:$0xff pattern:$0x75316420]
        %312 = vrot.lane.b32.xlu0 %v308, 17
        %v313 = vpop.permute.xlu0 %312
        %314 = vrot.lane.b32.xlu0 %v309, 17
        %v315 = vpop.permute.xlu0 %314
        %v316 = vlaneseq
        %v317 = vand.u32 %v316, 127
        %vm318 = vcmp.lt.s32.totalorder %v317, 17
        %v319 = vsel %vm318, %v313, %v315
        %v320 = vsel %vm318, %v315, %v313
        %v322 = vperm.slane %v305, 0
        %v323 = vperm.slane %v305, 1
        %v326 = vmul.f32 %v320, %v322
        %v327 = vmul.f32 %v319, %v323
        %v328 = vld [vmem:[%s2] sm:$0xff]
        %s329 = scalar_lea.vmem %s1, 1
        %v330 = vld [vmem:[%s329] ss:$8 sm:$0x3]
        %331 = vst [vmem:[#allocation1] ss:$2 sm:$0xff] %v304
        %v332 = vld.sshfl [vmem:[#allocation1] sm:$0xff pattern:$0x75316420]
        %v333 = vld.sshfl [vmem:[#allocation1 + $0x8] sm:$0xff pattern:$0x75316420]
        %336 = vrot.lane.b32.xlu0 %v332, 16
        %v337 = vpop.permute.xlu0 %336
        %338 = vrot.lane.b32.xlu0 %v333, 16
        %v339 = vpop.permute.xlu0 %338
        %vm340 = vcmp.lt.s32.totalorder %v317, 16
        %v341 = vsel %vm340, %v337, %v339
        %v342 = vsel %vm340, %v339, %v337
        %v344 = vperm.slane %v330, 0
        %v345 = vperm.slane %v330, 1
        %v348 = vmul.f32 %v342, %v344
        %v349 = vmul.f32 %v341, %v345
        %s350 = scalar_lea.vmem %s2, 8
        %v351 = vld [vmem:[%s350] sm:$0xff]
        %vm352 = vcmask 31744
        %v354 = vsel %vm352, %v351, 0
        %vm356 = vcmask 1043456
        %v358 = vsel %vm356, %v348, 0
        %v361 = vsel %vm356, %v349, 0
        %363 = vmatpush.msra.mxu0 0.0
        %364 = vmatpush.msra.mxu0 0.0
        %365 = vmatpush.msra.mxu0 0.0
        %366 = vmatpush.msra.mxu0 0.0
        %367 = vmatpush.msra.mxu0 0.0
        %368 = vmatpush.msra.mxu0 0.0
        %369 = vmatpush.msra.mxu0 0.0
        %370 = vmatpush.msra.mxu0 0.0
        %371 = vmatpush.msra.mxu0 0.0
        %372 = vmatpush.msra.mxu0 0.0
        %373 = vmatpush.msra.mxu0 0.0
        %374 = vmatpush.msra.mxu0 0.0
        %375 = vmatpush.msra.mxu0 0.0
        %376 = vmatpush.msra.mxu0 0.0
        %377 = vmatpush.msra.mxu0 0.0
        %378 = vmatpush.msra.mxu0 %v358
        %379 = vmatmul.f32.gmra.mxu0 %v354
        %v380 = vpop.f32.mrf.mxu0
        %v381 = vadd.f32 0.0, %v380
        %382 = vdwg.mxu0
        %383 = vmatpush.msra.mxu0 0.0
        %384 = vmatpush.msra.mxu0 0.0
        %385 = vmatpush.msra.mxu0 0.0
        %386 = vmatpush.msra.mxu0 0.0
        %387 = vmatpush.msra.mxu0 0.0
        %388 = vmatpush.msra.mxu0 0.0
        %389 = vmatpush.msra.mxu0 0.0
        %390 = vmatpush.msra.mxu0 0.0
        %391 = vmatpush.msra.mxu0 0.0
        %392 = vmatpush.msra.mxu0 0.0
        %393 = vmatpush.msra.mxu0 0.0
        %394 = vmatpush.msra.mxu0 0.0
        %395 = vmatpush.msra.mxu0 0.0
        %396 = vmatpush.msra.mxu0 0.0
        %397 = vmatpush.msra.mxu0 0.0
        %398 = vmatpush.msra.mxu0 %v361
        %399 = vmatmul.f32.gmra.mxu0 %v354
        %v400 = vpop.f32.mrf.mxu0
        %v401 = vadd.f32 0.0, %v400
        %402 = vdwg.mxu0
        %v404 = vsel %vm352, %v328, 0
        %v407 = vsel %vm356, %v326, 0
        %v410 = vsel %vm356, %v327, 0
        %412 = vmatpush.msra.mxu0 0.0
        %413 = vmatpush.msra.mxu0 0.0
        %414 = vmatpush.msra.mxu0 0.0
        %415 = vmatpush.msra.mxu0 0.0
        %416 = vmatpush.msra.mxu0 0.0
        %417 = vmatpush.msra.mxu0 0.0
        %418 = vmatpush.msra.mxu0 0.0
        %419 = vmatpush.msra.mxu0 0.0
        %420 = vmatpush.msra.mxu0 0.0
        %421 = vmatpush.msra.mxu0 0.0
        %422 = vmatpush.msra.mxu0 0.0
        %423 = vmatpush.msra.mxu0 0.0
        %424 = vmatpush.msra.mxu0 0.0
        %425 = vmatpush.msra.mxu0 0.0
        %426 = vmatpush.msra.mxu0 0.0
        %427 = vmatpush.msra.mxu0 %v407
        %428 = vmatmul.f32.gmra.mxu0 %v404
        %v429 = vpop.f32.mrf.mxu0
        %v430 = vadd.f32 %v381, %v429
        %431 = vdwg.mxu0
        %432 = vmatpush.msra.mxu0 0.0
        %433 = vmatpush.msra.mxu0 0.0
        %434 = vmatpush.msra.mxu0 0.0
        %435 = vmatpush.msra.mxu0 0.0
        %436 = vmatpush.msra.mxu0 0.0
        %437 = vmatpush.msra.mxu0 0.0
        %438 = vmatpush.msra.mxu0 0.0
        %439 = vmatpush.msra.mxu0 0.0
        %440 = vmatpush.msra.mxu0 0.0
        %441 = vmatpush.msra.mxu0 0.0
        %442 = vmatpush.msra.mxu0 0.0
        %443 = vmatpush.msra.mxu0 0.0
        %444 = vmatpush.msra.mxu0 0.0
        %445 = vmatpush.msra.mxu0 0.0
        %446 = vmatpush.msra.mxu0 0.0
        %447 = vmatpush.msra.mxu0 %v410
        %448 = vmatmul.f32.gmra.mxu0 %v404
        %v449 = vpop.f32.mrf.mxu0
        %v450 = vadd.f32 %v401, %v449
        %451 = vdwg.mxu0
        %s452 = scalar_lea.vmem %s1, 2
        %v453 = vld [vmem:[%s452] ss:$8 sm:$0x3]
        %454 = vst [vmem:[#allocation1] ss:$2 sm:$0xff] %v304
        %v455 = vld.sshfl [vmem:[#allocation1] sm:$0xff pattern:$0x75316420]
        %v456 = vld.sshfl [vmem:[#allocation1 + $0x8] sm:$0xff pattern:$0x75316420]
        %459 = vrot.lane.b32.xlu0 %v455, 15
        %v460 = vpop.permute.xlu0 %459
        %461 = vrot.lane.b32.xlu0 %v456, 15
        %v462 = vpop.permute.xlu0 %461
        %vm463 = vcmp.lt.s32.totalorder %v317, 15
        %v464 = vsel %vm463, %v460, %v462
        %v465 = vsel %vm463, %v462, %v460
        %v467 = vperm.slane %v453, 0
        %v468 = vperm.slane %v453, 1
        %v471 = vmul.f32 %v465, %v467
        %v472 = vmul.f32 %v464, %v468
        %s473 = scalar_lea.vmem %s2, 16
        %v474 = vld [vmem:[%s473] sm:$0xff]
        %v476 = vsel %vm352, %v474, 0
        %v479 = vsel %vm356, %v471, 0
        %v482 = vsel %vm356, %v472, 0
        %484 = vmatpush.msra.mxu0 0.0
        %485 = vmatpush.msra.mxu0 0.0
        %486 = vmatpush.msra.mxu0 0.0
        %487 = vmatpush.msra.mxu0 0.0
        %488 = vmatpush.msra.mxu0 0.0
        %489 = vmatpush.msra.mxu0 0.0
        %490 = vmatpush.msra.mxu0 0.0
        %491 = vmatpush.msra.mxu0 0.0
        %492 = vmatpush.msra.mxu0 0.0
        %493 = vmatpush.msra.mxu0 0.0
        %494 = vmatpush.msra.mxu0 0.0
        %495 = vmatpush.msra.mxu0 0.0
        %496 = vmatpush.msra.mxu0 0.0
        %497 = vmatpush.msra.mxu0 0.0
        %498 = vmatpush.msra.mxu0 0.0
        %499 = vmatpush.msra.mxu0 %v479
        %500 = vmatmul.f32.gmra.mxu0 %v476
        %v501 = vpop.f32.mrf.mxu0
        %v502 = vadd.f32 0.0, %v501
        %503 = vdwg.mxu0
        %504 = vmatpush.msra.mxu0 0.0
        %505 = vmatpush.msra.mxu0 0.0
        %506 = vmatpush.msra.mxu0 0.0
        %507 = vmatpush.msra.mxu0 0.0
        %508 = vmatpush.msra.mxu0 0.0
        %509 = vmatpush.msra.mxu0 0.0
        %510 = vmatpush.msra.mxu0 0.0
        %511 = vmatpush.msra.mxu0 0.0
        %512 = vmatpush.msra.mxu0 0.0
        %513 = vmatpush.msra.mxu0 0.0
        %514 = vmatpush.msra.mxu0 0.0
        %515 = vmatpush.msra.mxu0 0.0
        %516 = vmatpush.msra.mxu0 0.0
        %517 = vmatpush.msra.mxu0 0.0
        %518 = vmatpush.msra.mxu0 0.0
        %519 = vmatpush.msra.mxu0 %v482
        %520 = vmatmul.f32.gmra.mxu0 %v476
        %v521 = vpop.f32.mrf.mxu0
        %v522 = vadd.f32 0.0, %v521
        %523 = vdwg.mxu0
        %v524 = vadd.f32 %v430, %v502
        %v525 = vadd.f32 %v450, %v522
        %s526 = scalar_lea.vmem %s1, 3
        %v527 = vld [vmem:[%s526] ss:$8 sm:$0x3]
        %528 = vst [vmem:[#allocation1] ss:$2 sm:$0xff] %v304
        %v529 = vld.sshfl [vmem:[#allocation1] sm:$0xff pattern:$0x75316420]
        %v530 = vld.sshfl [vmem:[#allocation1 + $0x8] sm:$0xff pattern:$0x75316420]
        %533 = vrot.lane.b32.xlu0 %v529, 1
        %v534 = vpop.permute.xlu0 %533
        %535 = vrot.lane.b32.xlu0 %v530, 1
        %v536 = vpop.permute.xlu0 %535
        %vm537 = vcmp.lt.s32.totalorder %v317, 1
        %v538 = vsel %vm537, %v534, %v536
        %v539 = vsel %vm537, %v536, %v534
        %v541 = vperm.slane %v527, 0
        %v542 = vperm.slane %v527, 1
        %v545 = vmul.f32 %v539, %v541
        %v546 = vmul.f32 %v538, %v542
        %s547 = scalar_lea.vmem %s2, 24
        %v548 = vld [vmem:[%s547] sm:$0xff]
        %v550 = vsel %vm352, %v548, 0
        %v553 = vsel %vm356, %v545, 0
        %v556 = vsel %vm356, %v546, 0
        %558 = vmatpush.msra.mxu0 0.0
        %559 = vmatpush.msra.mxu0 0.0
        %560 = vmatpush.msra.mxu0 0.0
        %561 = vmatpush.msra.mxu0 0.0
        %562 = vmatpush.msra.mxu0 0.0
        %563 = vmatpush.msra.mxu0 0.0
        %564 = vmatpush.msra.mxu0 0.0
        %565 = vmatpush.msra.mxu0 0.0
        %566 = vmatpush.msra.mxu0 0.0
        %567 = vmatpush.msra.mxu0 0.0
        %568 = vmatpush.msra.mxu0 0.0
        %569 = vmatpush.msra.mxu0 0.0
        %570 = vmatpush.msra.mxu0 0.0
        %571 = vmatpush.msra.mxu0 0.0
        %572 = vmatpush.msra.mxu0 0.0
        %573 = vmatpush.msra.mxu0 %v553
        %574 = vmatmul.f32.gmra.mxu0 %v550
        %v575 = vpop.f32.mrf.mxu0
        %v576 = vadd.f32 0.0, %v575
        %577 = vdwg.mxu0
        %578 = vmatpush.msra.mxu0 0.0
        %579 = vmatpush.msra.mxu0 0.0
        %580 = vmatpush.msra.mxu0 0.0
        %581 = vmatpush.msra.mxu0 0.0
        %582 = vmatpush.msra.mxu0 0.0
        %583 = vmatpush.msra.mxu0 0.0
        %584 = vmatpush.msra.mxu0 0.0
        %585 = vmatpush.msra.mxu0 0.0
        %586 = vmatpush.msra.mxu0 0.0
        %587 = vmatpush.msra.mxu0 0.0
        %588 = vmatpush.msra.mxu0 0.0
        %589 = vmatpush.msra.mxu0 0.0
        %590 = vmatpush.msra.mxu0 0.0
        %591 = vmatpush.msra.mxu0 0.0
        %592 = vmatpush.msra.mxu0 0.0
        %593 = vmatpush.msra.mxu0 %v556
        %594 = vmatmul.f32.gmra.mxu0 %v550
        %v595 = vpop.f32.mrf.mxu0
        %v596 = vadd.f32 0.0, %v595
        %597 = vdwg.mxu0
        %v598 = vadd.f32 %v524, %v576
        %v599 = vadd.f32 %v525, %v596
        %s600 = scalar_lea.vmem %s2, 32
        %v601 = vld [vmem:[%s600] sm:$0xff]
        %602 = vst [vmem:[#allocation1] ss:$2 sm:$0xff] %v304
        %v603 = vld.sshfl [vmem:[#allocation1] sm:$0xff pattern:$0x75316420]
        %v604 = vld.sshfl [vmem:[#allocation1 + $0x8] sm:$0xff pattern:$0x75316420]
        %v606 = vsel %vm352, %v601, 0
        %v608 = vsel %vm356, %v603, 0
        %v610 = vsel %vm356, %v604, 0
        %612 = vmatpush.msra.mxu0 0.0
        %613 = vmatpush.msra.mxu0 0.0
        %614 = vmatpush.msra.mxu0 0.0
        %615 = vmatpush.msra.mxu0 0.0
        %616 = vmatpush.msra.mxu0 0.0
        %617 = vmatpush.msra.mxu0 0.0
        %618 = vmatpush.msra.mxu0 0.0
        %619 = vmatpush.msra.mxu0 0.0
        %620 = vmatpush.msra.mxu0 0.0
        %621 = vmatpush.msra.mxu0 0.0
        %622 = vmatpush.msra.mxu0 0.0
        %623 = vmatpush.msra.mxu0 0.0
        %624 = vmatpush.msra.mxu0 0.0
        %625 = vmatpush.msra.mxu0 0.0
        %626 = vmatpush.msra.mxu0 0.0
        %627 = vmatpush.msra.mxu0 %v608
        %628 = vmatmul.f32.gmra.mxu0 %v606
        %v629 = vpop.f32.mrf.mxu0
        %v630 = vadd.f32 0.0, %v629
        %631 = vdwg.mxu0
        %632 = vmatpush.msra.mxu0 0.0
        %633 = vmatpush.msra.mxu0 0.0
        %634 = vmatpush.msra.mxu0 0.0
        %635 = vmatpush.msra.mxu0 0.0
        %636 = vmatpush.msra.mxu0 0.0
        %637 = vmatpush.msra.mxu0 0.0
        %638 = vmatpush.msra.mxu0 0.0
        %639 = vmatpush.msra.mxu0 0.0
        %640 = vmatpush.msra.mxu0 0.0
        %641 = vmatpush.msra.mxu0 0.0
        %642 = vmatpush.msra.mxu0 0.0
        %643 = vmatpush.msra.mxu0 0.0
        %644 = vmatpush.msra.mxu0 0.0
        %645 = vmatpush.msra.mxu0 0.0
        %646 = vmatpush.msra.mxu0 0.0
        %647 = vmatpush.msra.mxu0 %v610
        %648 = vmatmul.f32.gmra.mxu0 %v606
        %v649 = vpop.f32.mrf.mxu0
        %v650 = vadd.f32 0.0, %v649
        %651 = vdwg.mxu0
        %v652 = vadd.f32 %v598, %v630
        %v653 = vadd.f32 %v599, %v650
        %s654 = scalar_lea.vmem %s1, 5
        %v655 = vld [vmem:[%s654] ss:$8 sm:$0x3]
        %656 = vst [vmem:[#allocation1] ss:$2 sm:$0xff] %v304
        %v657 = vld.sshfl [vmem:[#allocation1] sm:$0xff pattern:$0x75316420]
        %v658 = vld.sshfl [vmem:[#allocation1 + $0x8] sm:$0xff pattern:$0x75316420]
        %661 = vrot.lane.b32.xlu0 %v657, 127
        %v662 = vpop.permute.xlu0 %661
        %663 = vrot.lane.b32.xlu0 %v658, 127
        %v664 = vpop.permute.xlu0 %663
        %vm665 = vcmp.lt.s32.totalorder %v317, 127
        %v666 = vsel %vm665, %v662, %v664
        %v667 = vsel %vm665, %v664, %v662
        %v669 = vperm.slane %v655, 0
        %v670 = vperm.slane %v655, 1
        %v673 = vmul.f32 %v666, %v669
        %v674 = vmul.f32 %v667, %v670
        %s675 = scalar_lea.vmem %s2, 40
        %v676 = vld [vmem:[%s675] sm:$0xff]
        %v678 = vsel %vm352, %v676, 0
        %v681 = vsel %vm356, %v673, 0
        %v684 = vsel %vm356, %v674, 0
        %686 = vmatpush.msra.mxu0 0.0
        %687 = vmatpush.msra.mxu0 0.0
        %688 = vmatpush.msra.mxu0 0.0
        %689 = vmatpush.msra.mxu0 0.0
        %690 = vmatpush.msra.mxu0 0.0
        %691 = vmatpush.msra.mxu0 0.0
        %692 = vmatpush.msra.mxu0 0.0
        %693 = vmatpush.msra.mxu0 0.0
        %694 = vmatpush.msra.mxu0 0.0
        %695 = vmatpush.msra.mxu0 0.0
        %696 = vmatpush.msra.mxu0 0.0
        %697 = vmatpush.msra.mxu0 0.0
        %698 = vmatpush.msra.mxu0 0.0
        %699 = vmatpush.msra.mxu0 0.0
        %700 = vmatpush.msra.mxu0 0.0
        %701 = vmatpush.msra.mxu0 %v681
        %702 = vmatmul.f32.gmra.mxu0 %v678
        %v703 = vpop.f32.mrf.mxu0
        %v704 = vadd.f32 0.0, %v703
        %705 = vdwg.mxu0
        %706 = vmatpush.msra.mxu0 0.0
        %707 = vmatpush.msra.mxu0 0.0
        %708 = vmatpush.msra.mxu0 0.0
        %709 = vmatpush.msra.mxu0 0.0
        %710 = vmatpush.msra.mxu0 0.0
        %711 = vmatpush.msra.mxu0 0.0
        %712 = vmatpush.msra.mxu0 0.0
        %713 = vmatpush.msra.mxu0 0.0
        %714 = vmatpush.msra.mxu0 0.0
        %715 = vmatpush.msra.mxu0 0.0
        %716 = vmatpush.msra.mxu0 0.0
        %717 = vmatpush.msra.mxu0 0.0
        %718 = vmatpush.msra.mxu0 0.0
        %719 = vmatpush.msra.mxu0 0.0
        %720 = vmatpush.msra.mxu0 0.0
        %721 = vmatpush.msra.mxu0 %v684
        %722 = vmatmul.f32.gmra.mxu0 %v678
        %v723 = vpop.f32.mrf.mxu0
        %v724 = vadd.f32 0.0, %v723
        %725 = vdwg.mxu0
        %v726 = vadd.f32 %v652, %v704
        %v727 = vadd.f32 %v653, %v724
        %s728 = scalar_lea.vmem %s1, 6
        %v729 = vld [vmem:[%s728] ss:$8 sm:$0x3]
        %730 = vst [vmem:[#allocation1] ss:$2 sm:$0xff] %v304
        %v731 = vld.sshfl [vmem:[#allocation1] sm:$0xff pattern:$0x75316420]
        %v732 = vld.sshfl [vmem:[#allocation1 + $0x8] sm:$0xff pattern:$0x75316420]
        %735 = vrot.lane.b32.xlu0 %v731, 113
        %v736 = vpop.permute.xlu0 %735
        %737 = vrot.lane.b32.xlu0 %v732, 113
        %v738 = vpop.permute.xlu0 %737
        %vm739 = vcmp.lt.s32.totalorder %v317, 113
        %v740 = vsel %vm739, %v736, %v738
        %v741 = vsel %vm739, %v738, %v736
        %v743 = vperm.slane %v729, 0
        %v744 = vperm.slane %v729, 1
        %v747 = vmul.f32 %v740, %v743
        %v748 = vmul.f32 %v741, %v744
        %s749 = scalar_lea.vmem %s2, 48
        %v750 = vld [vmem:[%s749] sm:$0xff]
        %v752 = vsel %vm352, %v750, 0
        %v755 = vsel %vm356, %v747, 0
        %v758 = vsel %vm356, %v748, 0
        %760 = vmatpush.msra.mxu0 0.0
        %761 = vmatpush.msra.mxu0 0.0
        %762 = vmatpush.msra.mxu0 0.0
        %763 = vmatpush.msra.mxu0 0.0
        %764 = vmatpush.msra.mxu0 0.0
        %765 = vmatpush.msra.mxu0 0.0
        %766 = vmatpush.msra.mxu0 0.0
        %767 = vmatpush.msra.mxu0 0.0
        %768 = vmatpush.msra.mxu0 0.0
        %769 = vmatpush.msra.mxu0 0.0
        %770 = vmatpush.msra.mxu0 0.0
        %771 = vmatpush.msra.mxu0 0.0
        %772 = vmatpush.msra.mxu0 0.0
        %773 = vmatpush.msra.mxu0 0.0
        %774 = vmatpush.msra.mxu0 0.0
        %775 = vmatpush.msra.mxu0 %v755
        %776 = vmatmul.f32.gmra.mxu0 %v752
        %v777 = vpop.f32.mrf.mxu0
        %v778 = vadd.f32 0.0, %v777
        %779 = vdwg.mxu0
        %780 = vmatpush.msra.mxu0 0.0
        %781 = vmatpush.msra.mxu0 0.0
        %782 = vmatpush.msra.mxu0 0.0
        %783 = vmatpush.msra.mxu0 0.0
        %784 = vmatpush.msra.mxu0 0.0
        %785 = vmatpush.msra.mxu0 0.0
        %786 = vmatpush.msra.mxu0 0.0
        %787 = vmatpush.msra.mxu0 0.0
        %788 = vmatpush.msra.mxu0 0.0
        %789 = vmatpush.msra.mxu0 0.0
        %790 = vmatpush.msra.mxu0 0.0
        %791 = vmatpush.msra.mxu0 0.0
        %792 = vmatpush.msra.mxu0 0.0
        %793 = vmatpush.msra.mxu0 0.0
        %794 = vmatpush.msra.mxu0 0.0
        %795 = vmatpush.msra.mxu0 %v758
        %796 = vmatmul.f32.gmra.mxu0 %v752
        %v797 = vpop.f32.mrf.mxu0
        %v798 = vadd.f32 0.0, %v797
        %799 = vdwg.mxu0
        %v800 = vadd.f32 %v726, %v778
        %v801 = vadd.f32 %v727, %v798
        %s802 = scalar_lea.vmem %s1, 7
        %v803 = vld [vmem:[%s802] ss:$8 sm:$0x3]
        %804 = vst [vmem:[#allocation1] ss:$2 sm:$0xff] %v304
        %v805 = vld.sshfl [vmem:[#allocation1] sm:$0xff pattern:$0x75316420]
        %v806 = vld.sshfl [vmem:[#allocation1 + $0x8] sm:$0xff pattern:$0x75316420]
        %809 = vrot.lane.b32.xlu0 %v805, 112
        %v810 = vpop.permute.xlu0 %809
        %811 = vrot.lane.b32.xlu0 %v806, 112
        %v812 = vpop.permute.xlu0 %811
        %vm813 = vcmp.lt.s32.totalorder %v317, 112
        %v814 = vsel %vm813, %v810, %v812
        %v815 = vsel %vm813, %v812, %v810
        %v817 = vperm.slane %v803, 0
        %v818 = vperm.slane %v803, 1
        %v821 = vmul.f32 %v814, %v817
        %v822 = vmul.f32 %v815, %v818
        %s823 = scalar_lea.vmem %s2, 56
        %v824 = vld [vmem:[%s823] sm:$0xff]
        %v826 = vsel %vm352, %v824, 0
        %v829 = vsel %vm356, %v821, 0
        %v832 = vsel %vm356, %v822, 0
        %834 = vmatpush.msra.mxu0 0.0
        %835 = vmatpush.msra.mxu0 0.0
        %836 = vmatpush.msra.mxu0 0.0
        %837 = vmatpush.msra.mxu0 0.0
        %838 = vmatpush.msra.mxu0 0.0
        %839 = vmatpush.msra.mxu0 0.0
        %840 = vmatpush.msra.mxu0 0.0
        %841 = vmatpush.msra.mxu0 0.0
        %842 = vmatpush.msra.mxu0 0.0
        %843 = vmatpush.msra.mxu0 0.0
        %844 = vmatpush.msra.mxu0 0.0
        %845 = vmatpush.msra.mxu0 0.0
        %846 = vmatpush.msra.mxu0 0.0
        %847 = vmatpush.msra.mxu0 0.0
        %848 = vmatpush.msra.mxu0 0.0
        %849 = vmatpush.msra.mxu0 %v829
        %850 = vmatmul.f32.gmra.mxu0 %v826
        %v851 = vpop.f32.mrf.mxu0
        %v852 = vadd.f32 0.0, %v851
        %853 = vdwg.mxu0
        %854 = vmatpush.msra.mxu0 0.0
        %855 = vmatpush.msra.mxu0 0.0
        %856 = vmatpush.msra.mxu0 0.0
        %857 = vmatpush.msra.mxu0 0.0
        %858 = vmatpush.msra.mxu0 0.0
        %859 = vmatpush.msra.mxu0 0.0
        %860 = vmatpush.msra.mxu0 0.0
        %861 = vmatpush.msra.mxu0 0.0
        %862 = vmatpush.msra.mxu0 0.0
        %863 = vmatpush.msra.mxu0 0.0
        %864 = vmatpush.msra.mxu0 0.0
        %865 = vmatpush.msra.mxu0 0.0
        %866 = vmatpush.msra.mxu0 0.0
        %867 = vmatpush.msra.mxu0 0.0
        %868 = vmatpush.msra.mxu0 0.0
        %869 = vmatpush.msra.mxu0 %v832
        %870 = vmatmul.f32.gmra.mxu0 %v826
        %v871 = vpop.f32.mrf.mxu0
        %v872 = vadd.f32 0.0, %v871
        %873 = vdwg.mxu0
        %v874 = vadd.f32 %v800, %v852
        %v875 = vadd.f32 %v801, %v872
        %s876 = scalar_lea.vmem %s1, 16
        %v877 = vld [vmem:[%s876] ss:$8 sm:$0x3]
        %878 = vst [vmem:[#allocation1] ss:$2 sm:$0xff] %v304
        %v879 = vld.sshfl [vmem:[#allocation1] sm:$0xff pattern:$0x75316420]
        %v880 = vld.sshfl [vmem:[#allocation1 + $0x8] sm:$0xff pattern:$0x75316420]
        %883 = vrot.lane.b32.xlu0 %v879, 111
        %v884 = vpop.permute.xlu0 %883
        %885 = vrot.lane.b32.xlu0 %v880, 111
        %v886 = vpop.permute.xlu0 %885
        %vm887 = vcmp.lt.s32.totalorder %v317, 111
        %v888 = vsel %vm887, %v884, %v886
        %v889 = vsel %vm887, %v886, %v884
        %v891 = vperm.slane %v877, 0
        %v892 = vperm.slane %v877, 1
        %v895 = vmul.f32 %v888, %v891
        %v896 = vmul.f32 %v889, %v892
        %s897 = scalar_lea.vmem %s2, 64
        %v898 = vld [vmem:[%s897] sm:$0xff]
        %v900 = vsel %vm352, %v898, 0
        %v903 = vsel %vm356, %v895, 0
        %v906 = vsel %vm356, %v896, 0
        %908 = vmatpush.msra.mxu0 0.0
        %909 = vmatpush.msra.mxu0 0.0
        %910 = vmatpush.msra.mxu0 0.0
        %911 = vmatpush.msra.mxu0 0.0
        %912 = vmatpush.msra.mxu0 0.0
        %913 = vmatpush.msra.mxu0 0.0
        %914 = vmatpush.msra.mxu0 0.0
        %915 = vmatpush.msra.mxu0 0.0
        %916 = vmatpush.msra.mxu0 0.0
        %917 = vmatpush.msra.mxu0 0.0
        %918 = vmatpush.msra.mxu0 0.0
        %919 = vmatpush.msra.mxu0 0.0
        %920 = vmatpush.msra.mxu0 0.0
        %921 = vmatpush.msra.mxu0 0.0
        %922 = vmatpush.msra.mxu0 0.0
        %923 = vmatpush.msra.mxu0 %v903
        %924 = vmatmul.f32.gmra.mxu0 %v900
        %v925 = vpop.f32.mrf.mxu0
        %v926 = vadd.f32 0.0, %v925
        %927 = vdwg.mxu0
        %928 = vmatpush.msra.mxu0 0.0
        %929 = vmatpush.msra.mxu0 0.0
        %930 = vmatpush.msra.mxu0 0.0
        %931 = vmatpush.msra.mxu0 0.0
        %932 = vmatpush.msra.mxu0 0.0
        %933 = vmatpush.msra.mxu0 0.0
        %934 = vmatpush.msra.mxu0 0.0
        %935 = vmatpush.msra.mxu0 0.0
        %936 = vmatpush.msra.mxu0 0.0
        %937 = vmatpush.msra.mxu0 0.0
        %938 = vmatpush.msra.mxu0 0.0
        %939 = vmatpush.msra.mxu0 0.0
        %940 = vmatpush.msra.mxu0 0.0
        %941 = vmatpush.msra.mxu0 0.0
        %942 = vmatpush.msra.mxu0 0.0
        %943 = vmatpush.msra.mxu0 %v906
        %944 = vmatmul.f32.gmra.mxu0 %v900
        %v945 = vpop.f32.mrf.mxu0
        %v946 = vadd.f32 0.0, %v945
        %947 = vdwg.mxu0
        %v948 = vadd.f32 %v874, %v926
        %v949 = vadd.f32 %v875, %v946
        %v950 = vld [vmem:[%s3] sm:$0xff]
        %952 = vset.pattern.permute.xlu0 0
        %953 = vperm.xlu0 %952, %v950
        %v954 = vpop.permute.xlu0 %953
        %v956 = vadd.f32 %v948, %v954
        %v957 = vadd.f32 %v949, %v954
        %v958 = vmax.f32 %v956, 0.0
        %v959 = vmax.f32 %v957, 0.0
        %s960 = scalar_lea.vmem %s1, 17
        %v961 = vld [vmem:[%s960] ss:$8 sm:$0x3]
        %962 = vrot.lane.b32.xlu0 %v958, 34
        %v963 = vpop.permute.xlu0 %962
        %964 = vrot.lane.b32.xlu0 %v959, 34
        %v965 = vpop.permute.xlu0 %964
        %vm966 = vcmp.lt.s32.totalorder %v317, 34
        %v967 = vsel %vm966, %v963, %v965
        %v968 = vsel %vm966, %v965, %v963
        %v970 = vperm.slane %v961, 0
        %v971 = vperm.slane %v961, 1
        %v974 = vmul.f32 %v968, %v970
        %v975 = vmul.f32 %v967, %v971
        %v976 = vld [vmem:[%s4] sm:$0xff]
        %s977 = scalar_lea.vmem %s1, 18
        %v978 = vld [vmem:[%s977] ss:$8 sm:$0x3]
        %979 = vrot.lane.b32.xlu0 %v958, 32
        %v980 = vpop.permute.xlu0 %979
        %981 = vrot.lane.b32.xlu0 %v959, 32
        %v982 = vpop.permute.xlu0 %981
        %vm983 = vcmp.lt.s32.totalorder %v317, 32
        %v984 = vsel %vm983, %v980, %v982
        %v985 = vsel %vm983, %v982, %v980
        %v987 = vperm.slane %v978, 0
        %v988 = vperm.slane %v978, 1
        %v991 = vmul.f32 %v985, %v987
        %v992 = vmul.f32 %v984, %v988
        %s993 = scalar_lea.vmem %s4, 8
        %v994 = vld [vmem:[%s993] sm:$0xff]
        %vm995 = vcmask 64512
        %v997 = vsel %vm995, %v994, 0
        %999 = vmatpush.msra.mxu0 0.0
        %1000 = vmatpush.msra.mxu0 0.0
        %1001 = vmatpush.msra.mxu0 0.0
        %1002 = vmatpush.msra.mxu0 0.0
        %1003 = vmatpush.msra.mxu0 0.0
        %1004 = vmatpush.msra.mxu0 0.0
        %1005 = vmatpush.msra.mxu0 0.0
        %1006 = vmatpush.msra.mxu0 0.0
        %1007 = vmatpush.msra.mxu0 0.0
        %1008 = vmatpush.msra.mxu0 0.0
        %1009 = vmatpush.msra.mxu0 0.0
        %1010 = vmatpush.msra.mxu0 0.0
        %1011 = vmatpush.msra.mxu0 0.0
        %1012 = vmatpush.msra.mxu0 0.0
        %1013 = vmatpush.msra.mxu0 0.0
        %1014 = vmatpush.msra.mxu0 %v991
        %1015 = vmatmul.f32.gmra.mxu0 %v997
        %v1016 = vpop.f32.mrf.mxu0
        %v1017 = vadd.f32 0.0, %v1016
        %1018 = vdwg.mxu0
        %1019 = vmatpush.msra.mxu0 0.0
        %1020 = vmatpush.msra.mxu0 0.0
        %1021 = vmatpush.msra.mxu0 0.0
        %1022 = vmatpush.msra.mxu0 0.0
        %1023 = vmatpush.msra.mxu0 0.0
        %1024 = vmatpush.msra.mxu0 0.0
        %1025 = vmatpush.msra.mxu0 0.0
        %1026 = vmatpush.msra.mxu0 0.0
        %1027 = vmatpush.msra.mxu0 0.0
        %1028 = vmatpush.msra.mxu0 0.0
        %1029 = vmatpush.msra.mxu0 0.0
        %1030 = vmatpush.msra.mxu0 0.0
        %1031 = vmatpush.msra.mxu0 0.0
        %1032 = vmatpush.msra.mxu0 0.0
        %1033 = vmatpush.msra.mxu0 0.0
        %1034 = vmatpush.msra.mxu0 %v992
        %1035 = vmatmul.f32.gmra.mxu0 %v997
        %v1036 = vpop.f32.mrf.mxu0
        %v1037 = vadd.f32 0.0, %v1036
        %1038 = vdwg.mxu0
        %v1040 = vsel %vm995, %v976, 0
        %1042 = vmatpush.msra.mxu0 0.0
        %1043 = vmatpush.msra.mxu0 0.0
        %1044 = vmatpush.msra.mxu0 0.0
        %1045 = vmatpush.msra.mxu0 0.0
        %1046 = vmatpush.msra.mxu0 0.0
        %1047 = vmatpush.msra.mxu0 0.0
        %1048 = vmatpush.msra.mxu0 0.0
        %1049 = vmatpush.msra.mxu0 0.0
        %1050 = vmatpush.msra.mxu0 0.0
        %1051 = vmatpush.msra.mxu0 0.0
        %1052 = vmatpush.msra.mxu0 0.0
        %1053 = vmatpush.msra.mxu0 0.0
        %1054 = vmatpush.msra.mxu0 0.0
        %1055 = vmatpush.msra.mxu0 0.0
        %1056 = vmatpush.msra.mxu0 0.0
        %1057 = vmatpush.msra.mxu0 %v974
        %1058 = vmatmul.f32.gmra.mxu0 %v1040
        %v1059 = vpop.f32.mrf.mxu0
        %v1060 = vadd.f32 %v1017, %v1059
        %1061 = vdwg.mxu0
        %1062 = vmatpush.msra.mxu0 0.0
        %1063 = vmatpush.msra.mxu0 0.0
        %1064 = vmatpush.msra.mxu0 0.0
        %1065 = vmatpush.msra.mxu0 0.0
        %1066 = vmatpush.msra.mxu0 0.0
        %1067 = vmatpush.msra.mxu0 0.0
        %1068 = vmatpush.msra.mxu0 0.0
        %1069 = vmatpush.msra.mxu0 0.0
        %1070 = vmatpush.msra.mxu0 0.0
        %1071 = vmatpush.msra.mxu0 0.0
        %1072 = vmatpush.msra.mxu0 0.0
        %1073 = vmatpush.msra.mxu0 0.0
        %1074 = vmatpush.msra.mxu0 0.0
        %1075 = vmatpush.msra.mxu0 0.0
        %1076 = vmatpush.msra.mxu0 0.0
        %1077 = vmatpush.msra.mxu0 %v975
        %1078 = vmatmul.f32.gmra.mxu0 %v1040
        %v1079 = vpop.f32.mrf.mxu0
        %v1080 = vadd.f32 %v1037, %v1079
        %1081 = vdwg.mxu0
        %s1082 = scalar_lea.vmem %s1, 19
        %v1083 = vld [vmem:[%s1082] ss:$8 sm:$0x3]
        %1084 = vrot.lane.b32.xlu0 %v958, 30
        %v1085 = vpop.permute.xlu0 %1084
        %1086 = vrot.lane.b32.xlu0 %v959, 30
        %v1087 = vpop.permute.xlu0 %1086
        %vm1088 = vcmp.lt.s32.totalorder %v317, 30
        %v1089 = vsel %vm1088, %v1085, %v1087
        %v1090 = vsel %vm1088, %v1087, %v1085
        %v1092 = vperm.slane %v1083, 0
        %v1093 = vperm.slane %v1083, 1
        %v1096 = vmul.f32 %v1090, %v1092
        %v1097 = vmul.f32 %v1089, %v1093
        %s1098 = scalar_lea.vmem %s4, 16
        %v1099 = vld [vmem:[%s1098] sm:$0xff]
        %v1101 = vsel %vm995, %v1099, 0
        %1103 = vmatpush.msra.mxu0 0.0
        %1104 = vmatpush.msra.mxu0 0.0
        %1105 = vmatpush.msra.mxu0 0.0
        %1106 = vmatpush.msra.mxu0 0.0
        %1107 = vmatpush.msra.mxu0 0.0
        %1108 = vmatpush.msra.mxu0 0.0
        %1109 = vmatpush.msra.mxu0 0.0
        %1110 = vmatpush.msra.mxu0 0.0
        %1111 = vmatpush.msra.mxu0 0.0
        %1112 = vmatpush.msra.mxu0 0.0
        %1113 = vmatpush.msra.mxu0 0.0
        %1114 = vmatpush.msra.mxu0 0.0
        %1115 = vmatpush.msra.mxu0 0.0
        %1116 = vmatpush.msra.mxu0 0.0
        %1117 = vmatpush.msra.mxu0 0.0
        %1118 = vmatpush.msra.mxu0 %v1096
        %1119 = vmatmul.f32.gmra.mxu0 %v1101
        %v1120 = vpop.f32.mrf.mxu0
        %v1121 = vadd.f32 0.0, %v1120
        %1122 = vdwg.mxu0
        %1123 = vmatpush.msra.mxu0 0.0
        %1124 = vmatpush.msra.mxu0 0.0
        %1125 = vmatpush.msra.mxu0 0.0
        %1126 = vmatpush.msra.mxu0 0.0
        %1127 = vmatpush.msra.mxu0 0.0
        %1128 = vmatpush.msra.mxu0 0.0
        %1129 = vmatpush.msra.mxu0 0.0
        %1130 = vmatpush.msra.mxu0 0.0
        %1131 = vmatpush.msra.mxu0 0.0
        %1132 = vmatpush.msra.mxu0 0.0
        %1133 = vmatpush.msra.mxu0 0.0
        %1134 = vmatpush.msra.mxu0 0.0
        %1135 = vmatpush.msra.mxu0 0.0
        %1136 = vmatpush.msra.mxu0 0.0
        %1137 = vmatpush.msra.mxu0 0.0
        %1138 = vmatpush.msra.mxu0 %v1097
        %1139 = vmatmul.f32.gmra.mxu0 %v1101
        %v1140 = vpop.f32.mrf.mxu0
        %v1141 = vadd.f32 0.0, %v1140
        %1142 = vdwg.mxu0
        %v1143 = vadd.f32 %v1060, %v1121
        %v1144 = vadd.f32 %v1080, %v1141
        %s1145 = scalar_lea.vmem %s1, 20
        %v1146 = vld [vmem:[%s1145] ss:$8 sm:$0x3]
        %1147 = vrot.lane.b32.xlu0 %v958, 2
        %v1148 = vpop.permute.xlu0 %1147
        %1149 = vrot.lane.b32.xlu0 %v959, 2
        %v1150 = vpop.permute.xlu0 %1149
        %vm1151 = vcmp.lt.s32.totalorder %v317, 2
        %v1152 = vsel %vm1151, %v1148, %v1150
        %v1153 = vsel %vm1151, %v1150, %v1148
        %v1155 = vperm.slane %v1146, 0
        %v1156 = vperm.slane %v1146, 1
        %v1159 = vmul.f32 %v1153, %v1155
        %v1160 = vmul.f32 %v1152, %v1156
        %s1161 = scalar_lea.vmem %s4, 24
        %v1162 = vld [vmem:[%s1161] sm:$0xff]
        %v1164 = vsel %vm995, %v1162, 0
        %1166 = vmatpush.msra.mxu0 0.0
        %1167 = vmatpush.msra.mxu0 0.0
        %1168 = vmatpush.msra.mxu0 0.0
        %1169 = vmatpush.msra.mxu0 0.0
        %1170 = vmatpush.msra.mxu0 0.0
        %1171 = vmatpush.msra.mxu0 0.0
        %1172 = vmatpush.msra.mxu0 0.0
        %1173 = vmatpush.msra.mxu0 0.0
        %1174 = vmatpush.msra.mxu0 0.0
        %1175 = vmatpush.msra.mxu0 0.0
        %1176 = vmatpush.msra.mxu0 0.0
        %1177 = vmatpush.msra.mxu0 0.0
        %1178 = vmatpush.msra.mxu0 0.0
        %1179 = vmatpush.msra.mxu0 0.0
        %1180 = vmatpush.msra.mxu0 0.0
        %1181 = vmatpush.msra.mxu0 %v1159
        %1182 = vmatmul.f32.gmra.mxu0 %v1164
        %v1183 = vpop.f32.mrf.mxu0
        %v1184 = vadd.f32 0.0, %v1183
        %1185 = vdwg.mxu0
        %1186 = vmatpush.msra.mxu0 0.0
        %1187 = vmatpush.msra.mxu0 0.0
        %1188 = vmatpush.msra.mxu0 0.0
        %1189 = vmatpush.msra.mxu0 0.0
        %1190 = vmatpush.msra.mxu0 0.0
        %1191 = vmatpush.msra.mxu0 0.0
        %1192 = vmatpush.msra.mxu0 0.0
        %1193 = vmatpush.msra.mxu0 0.0
        %1194 = vmatpush.msra.mxu0 0.0
        %1195 = vmatpush.msra.mxu0 0.0
        %1196 = vmatpush.msra.mxu0 0.0
        %1197 = vmatpush.msra.mxu0 0.0
        %1198 = vmatpush.msra.mxu0 0.0
        %1199 = vmatpush.msra.mxu0 0.0
        %1200 = vmatpush.msra.mxu0 0.0
        %1201 = vmatpush.msra.mxu0 %v1160
        %1202 = vmatmul.f32.gmra.mxu0 %v1164
        %v1203 = vpop.f32.mrf.mxu0
        %v1204 = vadd.f32 0.0, %v1203
        %1205 = vdwg.mxu0
        %v1206 = vadd.f32 %v1143, %v1184
        %v1207 = vadd.f32 %v1144, %v1204
        %s1208 = scalar_lea.vmem %s4, 32
        %v1209 = vld [vmem:[%s1208] sm:$0xff]
        %v1211 = vsel %vm995, %v1209, 0
        %1213 = vmatpush.msra.mxu0 0.0
        %1214 = vmatpush.msra.mxu0 0.0
        %1215 = vmatpush.msra.mxu0 0.0
        %1216 = vmatpush.msra.mxu0 0.0
        %1217 = vmatpush.msra.mxu0 0.0
        %1218 = vmatpush.msra.mxu0 0.0
        %1219 = vmatpush.msra.mxu0 0.0
        %1220 = vmatpush.msra.mxu0 0.0
        %1221 = vmatpush.msra.mxu0 0.0
        %1222 = vmatpush.msra.mxu0 0.0
        %1223 = vmatpush.msra.mxu0 0.0
        %1224 = vmatpush.msra.mxu0 0.0
        %1225 = vmatpush.msra.mxu0 0.0
        %1226 = vmatpush.msra.mxu0 0.0
        %1227 = vmatpush.msra.mxu0 0.0
        %1228 = vmatpush.msra.mxu0 %v958
        %1229 = vmatmul.f32.gmra.mxu0 %v1211
        %v1230 = vpop.f32.mrf.mxu0
        %v1231 = vadd.f32 0.0, %v1230
        %1232 = vdwg.mxu0
        %1233 = vmatpush.msra.mxu0 0.0
        %1234 = vmatpush.msra.mxu0 0.0
        %1235 = vmatpush.msra.mxu0 0.0
        %1236 = vmatpush.msra.mxu0 0.0
        %1237 = vmatpush.msra.mxu0 0.0
        %1238 = vmatpush.msra.mxu0 0.0
        %1239 = vmatpush.msra.mxu0 0.0
        %1240 = vmatpush.msra.mxu0 0.0
        %1241 = vmatpush.msra.mxu0 0.0
        %1242 = vmatpush.msra.mxu0 0.0
        %1243 = vmatpush.msra.mxu0 0.0
        %1244 = vmatpush.msra.mxu0 0.0
        %1245 = vmatpush.msra.mxu0 0.0
        %1246 = vmatpush.msra.mxu0 0.0
        %1247 = vmatpush.msra.mxu0 0.0
        %1248 = vmatpush.msra.mxu0 %v959
        %1249 = vmatmul.f32.gmra.mxu0 %v1211
        %v1250 = vpop.f32.mrf.mxu0
        %v1251 = vadd.f32 0.0, %v1250
        %1252 = vdwg.mxu0
        %v1253 = vadd.f32 %v1206, %v1231
        %v1254 = vadd.f32 %v1207, %v1251
        %s1255 = scalar_lea.vmem %s1, 22
        %v1256 = vld [vmem:[%s1255] ss:$8 sm:$0x3]
        %1257 = vrot.lane.b32.xlu0 %v958, 126
        %v1258 = vpop.permute.xlu0 %1257
        %1259 = vrot.lane.b32.xlu0 %v959, 126
        %v1260 = vpop.permute.xlu0 %1259
        %vm1261 = vcmp.lt.s32.totalorder %v317, 126
        %v1262 = vsel %vm1261, %v1258, %v1260
        %v1263 = vsel %vm1261, %v1260, %v1258
        %v1265 = vperm.slane %v1256, 0
        %v1266 = vperm.slane %v1256, 1
        %v1269 = vmul.f32 %v1262, %v1265
        %v1270 = vmul.f32 %v1263, %v1266
        %s1271 = scalar_lea.vmem %s4, 40
        %v1272 = vld [vmem:[%s1271] sm:$0xff]
        %v1274 = vsel %vm995, %v1272, 0
        %1276 = vmatpush.msra.mxu0 0.0
        %1277 = vmatpush.msra.mxu0 0.0
        %1278 = vmatpush.msra.mxu0 0.0
        %1279 = vmatpush.msra.mxu0 0.0
        %1280 = vmatpush.msra.mxu0 0.0
        %1281 = vmatpush.msra.mxu0 0.0
        %1282 = vmatpush.msra.mxu0 0.0
        %1283 = vmatpush.msra.mxu0 0.0
        %1284 = vmatpush.msra.mxu0 0.0
        %1285 = vmatpush.msra.mxu0 0.0
        %1286 = vmatpush.msra.mxu0 0.0
        %1287 = vmatpush.msra.mxu0 0.0
        %1288 = vmatpush.msra.mxu0 0.0
        %1289 = vmatpush.msra.mxu0 0.0
        %1290 = vmatpush.msra.mxu0 0.0
        %1291 = vmatpush.msra.mxu0 %v1269
        %1292 = vmatmul.f32.gmra.mxu0 %v1274
        %v1293 = vpop.f32.mrf.mxu0
        %v1294 = vadd.f32 0.0, %v1293
        %1295 = vdwg.mxu0
        %1296 = vmatpush.msra.mxu0 0.0
        %1297 = vmatpush.msra.mxu0 0.0
        %1298 = vmatpush.msra.mxu0 0.0
        %1299 = vmatpush.msra.mxu0 0.0
        %1300 = vmatpush.msra.mxu0 0.0
        %1301 = vmatpush.msra.mxu0 0.0
        %1302 = vmatpush.msra.mxu0 0.0
        %1303 = vmatpush.msra.mxu0 0.0
        %1304 = vmatpush.msra.mxu0 0.0
        %1305 = vmatpush.msra.mxu0 0.0
        %1306 = vmatpush.msra.mxu0 0.0
        %1307 = vmatpush.msra.mxu0 0.0
        %1308 = vmatpush.msra.mxu0 0.0
        %1309 = vmatpush.msra.mxu0 0.0
        %1310 = vmatpush.msra.mxu0 0.0
        %1311 = vmatpush.msra.mxu0 %v1270
        %1312 = vmatmul.f32.gmra.mxu0 %v1274
        %v1313 = vpop.f32.mrf.mxu0
        %v1314 = vadd.f32 0.0, %v1313
        %1315 = vdwg.mxu0
        %v1316 = vadd.f32 %v1253, %v1294
        %v1317 = vadd.f32 %v1254, %v1314
        %s1318 = scalar_lea.vmem %s1, 23
        %v1319 = vld [vmem:[%s1318] ss:$8 sm:$0x3]
        %1320 = vrot.lane.b32.xlu0 %v958, 98
        %v1321 = vpop.permute.xlu0 %1320
        %1322 = vrot.lane.b32.xlu0 %v959, 98
        %v1323 = vpop.permute.xlu0 %1322
        %vm1324 = vcmp.lt.s32.totalorder %v317, 98
        %v1325 = vsel %vm1324, %v1321, %v1323
        %v1326 = vsel %vm1324, %v1323, %v1321
        %v1328 = vperm.slane %v1319, 0
        %v1329 = vperm.slane %v1319, 1
        %v1332 = vmul.f32 %v1325, %v1328
        %v1333 = vmul.f32 %v1326, %v1329
        %s1334 = scalar_lea.vmem %s4, 48
        %v1335 = vld [vmem:[%s1334] sm:$0xff]
        %v1337 = vsel %vm995, %v1335, 0
        %1339 = vmatpush.msra.mxu0 0.0
        %1340 = vmatpush.msra.mxu0 0.0
        %1341 = vmatpush.msra.mxu0 0.0
        %1342 = vmatpush.msra.mxu0 0.0
        %1343 = vmatpush.msra.mxu0 0.0
        %1344 = vmatpush.msra.mxu0 0.0
        %1345 = vmatpush.msra.mxu0 0.0
        %1346 = vmatpush.msra.mxu0 0.0
        %1347 = vmatpush.msra.mxu0 0.0
        %1348 = vmatpush.msra.mxu0 0.0
        %1349 = vmatpush.msra.mxu0 0.0
        %1350 = vmatpush.msra.mxu0 0.0
        %1351 = vmatpush.msra.mxu0 0.0
        %1352 = vmatpush.msra.mxu0 0.0
        %1353 = vmatpush.msra.mxu0 0.0
        %1354 = vmatpush.msra.mxu0 %v1332
        %1355 = vmatmul.f32.gmra.mxu0 %v1337
        %v1356 = vpop.f32.mrf.mxu0
        %v1357 = vadd.f32 0.0, %v1356
        %1358 = vdwg.mxu0
        %1359 = vmatpush.msra.mxu0 0.0
        %1360 = vmatpush.msra.mxu0 0.0
        %1361 = vmatpush.msra.mxu0 0.0
        %1362 = vmatpush.msra.mxu0 0.0
        %1363 = vmatpush.msra.mxu0 0.0
        %1364 = vmatpush.msra.mxu0 0.0
        %1365 = vmatpush.msra.mxu0 0.0
        %1366 = vmatpush.msra.mxu0 0.0
        %1367 = vmatpush.msra.mxu0 0.0
        %1368 = vmatpush.msra.mxu0 0.0
        %1369 = vmatpush.msra.mxu0 0.0
        %1370 = vmatpush.msra.mxu0 0.0
        %1371 = vmatpush.msra.mxu0 0.0
        %1372 = vmatpush.msra.mxu0 0.0
        %1373 = vmatpush.msra.mxu0 0.0
        %1374 = vmatpush.msra.mxu0 %v1333
        %1375 = vmatmul.f32.gmra.mxu0 %v1337
        %v1376 = vpop.f32.mrf.mxu0
        %v1377 = vadd.f32 0.0, %v1376
        %1378 = vdwg.mxu0
        %v1379 = vadd.f32 %v1316, %v1357
        %v1380 = vadd.f32 %v1317, %v1377
        %s1381 = scalar_lea.vmem %s1, 32
        %v1382 = vld [vmem:[%s1381] ss:$8 sm:$0x3]
        %1383 = vrot.lane.b32.xlu0 %v958, 96
        %v1384 = vpop.permute.xlu0 %1383
        %1385 = vrot.lane.b32.xlu0 %v959, 96
        %v1386 = vpop.permute.xlu0 %1385
        %vm1387 = vcmp.lt.s32.totalorder %v317, 96
        %v1388 = vsel %vm1387, %v1384, %v1386
        %v1389 = vsel %vm1387, %v1386, %v1384
        %v1391 = vperm.slane %v1382, 0
        %v1392 = vperm.slane %v1382, 1
        %v1395 = vmul.f32 %v1388, %v1391
        %v1396 = vmul.f32 %v1389, %v1392
        %s1397 = scalar_lea.vmem %s4, 56
        %v1398 = vld [vmem:[%s1397] sm:$0xff]
        %v1400 = vsel %vm995, %v1398, 0
        %1402 = vmatpush.msra.mxu0 0.0
        %1403 = vmatpush.msra.mxu0 0.0
        %1404 = vmatpush.msra.mxu0 0.0
        %1405 = vmatpush.msra.mxu0 0.0
        %1406 = vmatpush.msra.mxu0 0.0
        %1407 = vmatpush.msra.mxu0 0.0
        %1408 = vmatpush.msra.mxu0 0.0
        %1409 = vmatpush.msra.mxu0 0.0
        %1410 = vmatpush.msra.mxu0 0.0
        %1411 = vmatpush.msra.mxu0 0.0
        %1412 = vmatpush.msra.mxu0 0.0
        %1413 = vmatpush.msra.mxu0 0.0
        %1414 = vmatpush.msra.mxu0 0.0
        %1415 = vmatpush.msra.mxu0 0.0
        %1416 = vmatpush.msra.mxu0 0.0
        %1417 = vmatpush.msra.mxu0 %v1395
        %1418 = vmatmul.f32.gmra.mxu0 %v1400
        %v1419 = vpop.f32.mrf.mxu0
        %v1420 = vadd.f32 0.0, %v1419
        %1421 = vdwg.mxu0
        %1422 = vmatpush.msra.mxu0 0.0
        %1423 = vmatpush.msra.mxu0 0.0
        %1424 = vmatpush.msra.mxu0 0.0
        %1425 = vmatpush.msra.mxu0 0.0
        %1426 = vmatpush.msra.mxu0 0.0
        %1427 = vmatpush.msra.mxu0 0.0
        %1428 = vmatpush.msra.mxu0 0.0
        %1429 = vmatpush.msra.mxu0 0.0
        %1430 = vmatpush.msra.mxu0 0.0
        %1431 = vmatpush.msra.mxu0 0.0
        %1432 = vmatpush.msra.mxu0 0.0
        %1433 = vmatpush.msra.mxu0 0.0
        %1434 = vmatpush.msra.mxu0 0.0
        %1435 = vmatpush.msra.mxu0 0.0
        %1436 = vmatpush.msra.mxu0 0.0
        %1437 = vmatpush.msra.mxu0 %v1396
        %1438 = vmatmul.f32.gmra.mxu0 %v1400
        %v1439 = vpop.f32.mrf.mxu0
        %v1440 = vadd.f32 0.0, %v1439
        %1441 = vdwg.mxu0
        %v1442 = vadd.f32 %v1379, %v1420
        %v1443 = vadd.f32 %v1380, %v1440
        %s1444 = scalar_lea.vmem %s1, 33
        %v1445 = vld [vmem:[%s1444] ss:$8 sm:$0x3]
        %1446 = vrot.lane.b32.xlu0 %v958, 94
        %v1447 = vpop.permute.xlu0 %1446
        %1448 = vrot.lane.b32.xlu0 %v959, 94
        %v1449 = vpop.permute.xlu0 %1448
        %vm1450 = vcmp.lt.s32.totalorder %v317, 94
        %v1451 = vsel %vm1450, %v1447, %v1449
        %v1452 = vsel %vm1450, %v1449, %v1447
        %v1454 = vperm.slane %v1445, 0
        %v1455 = vperm.slane %v1445, 1
        %v1458 = vmul.f32 %v1451, %v1454
        %v1459 = vmul.f32 %v1452, %v1455
        %s1460 = scalar_lea.vmem %s4, 64
        %v1461 = vld [vmem:[%s1460] sm:$0xff]
        %v1463 = vsel %vm995, %v1461, 0
        %1465 = vmatpush.msra.mxu0 0.0
        %1466 = vmatpush.msra.mxu0 0.0
        %1467 = vmatpush.msra.mxu0 0.0
        %1468 = vmatpush.msra.mxu0 0.0
        %1469 = vmatpush.msra.mxu0 0.0
        %1470 = vmatpush.msra.mxu0 0.0
        %1471 = vmatpush.msra.mxu0 0.0
        %1472 = vmatpush.msra.mxu0 0.0
        %1473 = vmatpush.msra.mxu0 0.0
        %1474 = vmatpush.msra.mxu0 0.0
        %1475 = vmatpush.msra.mxu0 0.0
        %1476 = vmatpush.msra.mxu0 0.0
        %1477 = vmatpush.msra.mxu0 0.0
        %1478 = vmatpush.msra.mxu0 0.0
        %1479 = vmatpush.msra.mxu0 0.0
        %1480 = vmatpush.msra.mxu0 %v1458
        %1481 = vmatmul.f32.gmra.mxu0 %v1463
        %v1482 = vpop.f32.mrf.mxu0
        %v1483 = vadd.f32 0.0, %v1482
        %1484 = vdwg.mxu0
        %1485 = vmatpush.msra.mxu0 0.0
        %1486 = vmatpush.msra.mxu0 0.0
        %1487 = vmatpush.msra.mxu0 0.0
        %1488 = vmatpush.msra.mxu0 0.0
        %1489 = vmatpush.msra.mxu0 0.0
        %1490 = vmatpush.msra.mxu0 0.0
        %1491 = vmatpush.msra.mxu0 0.0
        %1492 = vmatpush.msra.mxu0 0.0
        %1493 = vmatpush.msra.mxu0 0.0
        %1494 = vmatpush.msra.mxu0 0.0
        %1495 = vmatpush.msra.mxu0 0.0
        %1496 = vmatpush.msra.mxu0 0.0
        %1497 = vmatpush.msra.mxu0 0.0
        %1498 = vmatpush.msra.mxu0 0.0
        %1499 = vmatpush.msra.mxu0 0.0
        %1500 = vmatpush.msra.mxu0 %v1459
        %1501 = vmatmul.f32.gmra.mxu0 %v1463
        %v1502 = vpop.f32.mrf.mxu0
        %v1503 = vadd.f32 0.0, %v1502
        %1504 = vdwg.mxu0
        %v1505 = vadd.f32 %v1442, %v1483
        %v1506 = vadd.f32 %v1443, %v1503
        %v1507 = vld [vmem:[%s5] sm:$0xff]
        %1509 = vset.pattern.permute.xlu0 0
        %1510 = vperm.xlu0 %1509, %v1507
        %v1511 = vpop.permute.xlu0 %1510
        %v1513 = vadd.f32 %v1505, %v1511
        %v1514 = vadd.f32 %v1506, %v1511
        %v1515 = vmax.f32 %v1513, 0.0
        %v1516 = vmax.f32 %v1514, 0.0
        %s1517 = scalar_lea.vmem %s1, 34
        %v1518 = vld [vmem:[%s1517] ss:$8 sm:$0x3]
        %1519 = vrot.lane.b32.xlu0 %v1515, 51
        %v1520 = vpop.permute.xlu0 %1519
        %1521 = vrot.lane.b32.xlu0 %v1516, 51
        %v1522 = vpop.permute.xlu0 %1521
        %vm1523 = vcmp.lt.s32.totalorder %v317, 51
        %v1524 = vsel %vm1523, %v1520, %v1522
        %v1525 = vsel %vm1523, %v1522, %v1520
        %v1527 = vperm.slane %v1518, 0
        %v1528 = vperm.slane %v1518, 1
        %v1531 = vmul.f32 %v1525, %v1527
        %v1532 = vmul.f32 %v1524, %v1528
        %v1533 = vld [vmem:[%s6] sm:$0xff]
        %s1534 = scalar_lea.vmem %s1, 35
        %v1535 = vld [vmem:[%s1534] ss:$8 sm:$0x3]
        %1536 = vrot.lane.b32.xlu0 %v1515, 48
        %v1537 = vpop.permute.xlu0 %1536
        %1538 = vrot.lane.b32.xlu0 %v1516, 48
        %v1539 = vpop.permute.xlu0 %1538
        %vm1540 = vcmp.lt.s32.totalorder %v317, 48
        %v1541 = vsel %vm1540, %v1537, %v1539
        %v1542 = vsel %vm1540, %v1539, %v1537
        %v1544 = vperm.slane %v1535, 0
        %v1545 = vperm.slane %v1535, 1
        %v1548 = vmul.f32 %v1542, %v1544
        %v1549 = vmul.f32 %v1541, %v1545
        %s1550 = scalar_lea.vmem %s6, 8
        %v1551 = vld [vmem:[%s1550] sm:$0xff]
        %v1553 = vsel %vm995, %v1551, 0
        %1555 = vmatpush.msra.mxu0 0.0
        %1556 = vmatpush.msra.mxu0 0.0
        %1557 = vmatpush.msra.mxu0 0.0
        %1558 = vmatpush.msra.mxu0 0.0
        %1559 = vmatpush.msra.mxu0 0.0
        %1560 = vmatpush.msra.mxu0 0.0
        %1561 = vmatpush.msra.mxu0 0.0
        %1562 = vmatpush.msra.mxu0 0.0
        %1563 = vmatpush.msra.mxu0 0.0
        %1564 = vmatpush.msra.mxu0 0.0
        %1565 = vmatpush.msra.mxu0 0.0
        %1566 = vmatpush.msra.mxu0 0.0
        %1567 = vmatpush.msra.mxu0 0.0
        %1568 = vmatpush.msra.mxu0 0.0
        %1569 = vmatpush.msra.mxu0 0.0
        %1570 = vmatpush.msra.mxu0 %v1548
        %1571 = vmatmul.f32.gmra.mxu0 %v1553
        %v1572 = vpop.f32.mrf.mxu0
        %v1573 = vadd.f32 0.0, %v1572
        %1574 = vdwg.mxu0
        %1575 = vmatpush.msra.mxu0 0.0
        %1576 = vmatpush.msra.mxu0 0.0
        %1577 = vmatpush.msra.mxu0 0.0
        %1578 = vmatpush.msra.mxu0 0.0
        %1579 = vmatpush.msra.mxu0 0.0
        %1580 = vmatpush.msra.mxu0 0.0
        %1581 = vmatpush.msra.mxu0 0.0
        %1582 = vmatpush.msra.mxu0 0.0
        %1583 = vmatpush.msra.mxu0 0.0
        %1584 = vmatpush.msra.mxu0 0.0
        %1585 = vmatpush.msra.mxu0 0.0
        %1586 = vmatpush.msra.mxu0 0.0
        %1587 = vmatpush.msra.mxu0 0.0
        %1588 = vmatpush.msra.mxu0 0.0
        %1589 = vmatpush.msra.mxu0 0.0
        %1590 = vmatpush.msra.mxu0 %v1549
        %1591 = vmatmul.f32.gmra.mxu0 %v1553
        %v1592 = vpop.f32.mrf.mxu0
        %v1593 = vadd.f32 0.0, %v1592
        %1594 = vdwg.mxu0
        %v1596 = vsel %vm995, %v1533, 0
        %1598 = vmatpush.msra.mxu0 0.0
        %1599 = vmatpush.msra.mxu0 0.0
        %1600 = vmatpush.msra.mxu0 0.0
        %1601 = vmatpush.msra.mxu0 0.0
        %1602 = vmatpush.msra.mxu0 0.0
        %1603 = vmatpush.msra.mxu0 0.0
        %1604 = vmatpush.msra.mxu0 0.0
        %1605 = vmatpush.msra.mxu0 0.0
        %1606 = vmatpush.msra.mxu0 0.0
        %1607 = vmatpush.msra.mxu0 0.0
        %1608 = vmatpush.msra.mxu0 0.0
        %1609 = vmatpush.msra.mxu0 0.0
        %1610 = vmatpush.msra.mxu0 0.0
        %1611 = vmatpush.msra.mxu0 0.0
        %1612 = vmatpush.msra.mxu0 0.0
        %1613 = vmatpush.msra.mxu0 %v1531
        %1614 = vmatmul.f32.gmra.mxu0 %v1596
        %v1615 = vpop.f32.mrf.mxu0
        %v1616 = vadd.f32 %v1573, %v1615
        %1617 = vdwg.mxu0
        %1618 = vmatpush.msra.mxu0 0.0
        %1619 = vmatpush.msra.mxu0 0.0
        %1620 = vmatpush.msra.mxu0 0.0
        %1621 = vmatpush.msra.mxu0 0.0
        %1622 = vmatpush.msra.mxu0 0.0
        %1623 = vmatpush.msra.mxu0 0.0
        %1624 = vmatpush.msra.mxu0 0.0
        %1625 = vmatpush.msra.mxu0 0.0
        %1626 = vmatpush.msra.mxu0 0.0
        %1627 = vmatpush.msra.mxu0 0.0
        %1628 = vmatpush.msra.mxu0 0.0
        %1629 = vmatpush.msra.mxu0 0.0
        %1630 = vmatpush.msra.mxu0 0.0
        %1631 = vmatpush.msra.mxu0 0.0
        %1632 = vmatpush.msra.mxu0 0.0
        %1633 = vmatpush.msra.mxu0 %v1532
        %1634 = vmatmul.f32.gmra.mxu0 %v1596
        %v1635 = vpop.f32.mrf.mxu0
        %v1636 = vadd.f32 %v1593, %v1635
        %1637 = vdwg.mxu0
        %s1638 = scalar_lea.vmem %s1, 36
        %v1639 = vld [vmem:[%s1638] ss:$8 sm:$0x3]
        %1640 = vrot.lane.b32.xlu0 %v1515, 45
        %v1641 = vpop.permute.xlu0 %1640
        %1642 = vrot.lane.b32.xlu0 %v1516, 45
        %v1643 = vpop.permute.xlu0 %1642
        %vm1644 = vcmp.lt.s32.totalorder %v317, 45
        %v1645 = vsel %vm1644, %v1641, %v1643
        %v1646 = vsel %vm1644, %v1643, %v1641
        %v1648 = vperm.slane %v1639, 0
        %v1649 = vperm.slane %v1639, 1
        %v1652 = vmul.f32 %v1646, %v1648
        %v1653 = vmul.f32 %v1645, %v1649
        %s1654 = scalar_lea.vmem %s6, 16
        %v1655 = vld [vmem:[%s1654] sm:$0xff]
        %v1657 = vsel %vm995, %v1655, 0
        %1659 = vmatpush.msra.mxu0 0.0
        %1660 = vmatpush.msra.mxu0 0.0
        %1661 = vmatpush.msra.mxu0 0.0
        %1662 = vmatpush.msra.mxu0 0.0
        %1663 = vmatpush.msra.mxu0 0.0
        %1664 = vmatpush.msra.mxu0 0.0
        %1665 = vmatpush.msra.mxu0 0.0
        %1666 = vmatpush.msra.mxu0 0.0
        %1667 = vmatpush.msra.mxu0 0.0
        %1668 = vmatpush.msra.mxu0 0.0
        %1669 = vmatpush.msra.mxu0 0.0
        %1670 = vmatpush.msra.mxu0 0.0
        %1671 = vmatpush.msra.mxu0 0.0
        %1672 = vmatpush.msra.mxu0 0.0
        %1673 = vmatpush.msra.mxu0 0.0
        %1674 = vmatpush.msra.mxu0 %v1652
        %1675 = vmatmul.f32.gmra.mxu0 %v1657
        %v1676 = vpop.f32.mrf.mxu0
        %v1677 = vadd.f32 0.0, %v1676
        %1678 = vdwg.mxu0
        %1679 = vmatpush.msra.mxu0 0.0
        %1680 = vmatpush.msra.mxu0 0.0
        %1681 = vmatpush.msra.mxu0 0.0
        %1682 = vmatpush.msra.mxu0 0.0
        %1683 = vmatpush.msra.mxu0 0.0
        %1684 = vmatpush.msra.mxu0 0.0
        %1685 = vmatpush.msra.mxu0 0.0
        %1686 = vmatpush.msra.mxu0 0.0
        %1687 = vmatpush.msra.mxu0 0.0
        %1688 = vmatpush.msra.mxu0 0.0
        %1689 = vmatpush.msra.mxu0 0.0
        %1690 = vmatpush.msra.mxu0 0.0
        %1691 = vmatpush.msra.mxu0 0.0
        %1692 = vmatpush.msra.mxu0 0.0
        %1693 = vmatpush.msra.mxu0 0.0
        %1694 = vmatpush.msra.mxu0 %v1653
        %1695 = vmatmul.f32.gmra.mxu0 %v1657
        %v1696 = vpop.f32.mrf.mxu0
        %v1697 = vadd.f32 0.0, %v1696
        %1698 = vdwg.mxu0
        %v1699 = vadd.f32 %v1616, %v1677
        %v1700 = vadd.f32 %v1636, %v1697
        %s1701 = scalar_lea.vmem %s1, 37
        %v1702 = vld [vmem:[%s1701] ss:$8 sm:$0x3]
        %1703 = vrot.lane.b32.xlu0 %v1515, 3
        %v1704 = vpop.permute.xlu0 %1703
        %1705 = vrot.lane.b32.xlu0 %v1516, 3
        %v1706 = vpop.permute.xlu0 %1705
        %vm1707 = vcmp.lt.s32.totalorder %v317, 3
        %v1708 = vsel %vm1707, %v1704, %v1706
        %v1709 = vsel %vm1707, %v1706, %v1704
        %v1711 = vperm.slane %v1702, 0
        %v1712 = vperm.slane %v1702, 1
        %v1715 = vmul.f32 %v1709, %v1711
        %v1716 = vmul.f32 %v1708, %v1712
        %s1717 = scalar_lea.vmem %s6, 24
        %v1718 = vld [vmem:[%s1717] sm:$0xff]
        %v1720 = vsel %vm995, %v1718, 0
        %1722 = vmatpush.msra.mxu0 0.0
        %1723 = vmatpush.msra.mxu0 0.0
        %1724 = vmatpush.msra.mxu0 0.0
        %1725 = vmatpush.msra.mxu0 0.0
        %1726 = vmatpush.msra.mxu0 0.0
        %1727 = vmatpush.msra.mxu0 0.0
        %1728 = vmatpush.msra.mxu0 0.0
        %1729 = vmatpush.msra.mxu0 0.0
        %1730 = vmatpush.msra.mxu0 0.0
        %1731 = vmatpush.msra.mxu0 0.0
        %1732 = vmatpush.msra.mxu0 0.0
        %1733 = vmatpush.msra.mxu0 0.0
        %1734 = vmatpush.msra.mxu0 0.0
        %1735 = vmatpush.msra.mxu0 0.0
        %1736 = vmatpush.msra.mxu0 0.0
        %1737 = vmatpush.msra.mxu0 %v1715
        %1738 = vmatmul.f32.gmra.mxu0 %v1720
        %v1739 = vpop.f32.mrf.mxu0
        %v1740 = vadd.f32 0.0, %v1739
        %1741 = vdwg.mxu0
        %1742 = vmatpush.msra.mxu0 0.0
        %1743 = vmatpush.msra.mxu0 0.0
        %1744 = vmatpush.msra.mxu0 0.0
        %1745 = vmatpush.msra.mxu0 0.0
        %1746 = vmatpush.msra.mxu0 0.0
        %1747 = vmatpush.msra.mxu0 0.0
        %1748 = vmatpush.msra.mxu0 0.0
        %1749 = vmatpush.msra.mxu0 0.0
        %1750 = vmatpush.msra.mxu0 0.0
        %1751 = vmatpush.msra.mxu0 0.0
        %1752 = vmatpush.msra.mxu0 0.0
        %1753 = vmatpush.msra.mxu0 0.0
        %1754 = vmatpush.msra.mxu0 0.0
        %1755 = vmatpush.msra.mxu0 0.0
        %1756 = vmatpush.msra.mxu0 0.0
        %1757 = vmatpush.msra.mxu0 %v1716
        %1758 = vmatmul.f32.gmra.mxu0 %v1720
        %v1759 = vpop.f32.mrf.mxu0
        %v1760 = vadd.f32 0.0, %v1759
        %1761 = vdwg.mxu0
        %v1762 = vadd.f32 %v1699, %v1740
        %v1763 = vadd.f32 %v1700, %v1760
        %s1764 = scalar_lea.vmem %s6, 32
        %v1765 = vld [vmem:[%s1764] sm:$0xff]
        %v1767 = vsel %vm995, %v1765, 0
        %1769 = vmatpush.msra.mxu0 0.0
        %1770 = vmatpush.msra.mxu0 0.0
        %1771 = vmatpush.msra.mxu0 0.0
        %1772 = vmatpush.msra.mxu0 0.0
        %1773 = vmatpush.msra.mxu0 0.0
        %1774 = vmatpush.msra.mxu0 0.0
        %1775 = vmatpush.msra.mxu0 0.0
        %1776 = vmatpush.msra.mxu0 0.0
        %1777 = vmatpush.msra.mxu0 0.0
        %1778 = vmatpush.msra.mxu0 0.0
        %1779 = vmatpush.msra.mxu0 0.0
        %1780 = vmatpush.msra.mxu0 0.0
        %1781 = vmatpush.msra.mxu0 0.0
        %1782 = vmatpush.msra.mxu0 0.0
        %1783 = vmatpush.msra.mxu0 0.0
        %1784 = vmatpush.msra.mxu0 %v1515
        %1785 = vmatmul.f32.gmra.mxu0 %v1767
        %v1786 = vpop.f32.mrf.mxu0
        %v1787 = vadd.f32 0.0, %v1786
        %1788 = vdwg.mxu0
        %1789 = vmatpush.msra.mxu0 0.0
        %1790 = vmatpush.msra.mxu0 0.0
        %1791 = vmatpush.msra.mxu0 0.0
        %1792 = vmatpush.msra.mxu0 0.0
        %1793 = vmatpush.msra.mxu0 0.0
        %1794 = vmatpush.msra.mxu0 0.0
        %1795 = vmatpush.msra.mxu0 0.0
        %1796 = vmatpush.msra.mxu0 0.0
        %1797 = vmatpush.msra.mxu0 0.0
        %1798 = vmatpush.msra.mxu0 0.0
        %1799 = vmatpush.msra.mxu0 0.0
        %1800 = vmatpush.msra.mxu0 0.0
        %1801 = vmatpush.msra.mxu0 0.0
        %1802 = vmatpush.msra.mxu0 0.0
        %1803 = vmatpush.msra.mxu0 0.0
        %1804 = vmatpush.msra.mxu0 %v1516
        %1805 = vmatmul.f32.gmra.mxu0 %v1767
        %v1806 = vpop.f32.mrf.mxu0
        %v1807 = vadd.f32 0.0, %v1806
        %1808 = vdwg.mxu0
        %v1809 = vadd.f32 %v1762, %v1787
        %v1810 = vadd.f32 %v1763, %v1807
        %s1811 = scalar_lea.vmem %s1, 39
        %v1812 = vld [vmem:[%s1811] ss:$8 sm:$0x3]
        %1813 = vrot.lane.b32.xlu0 %v1515, 125
        %v1814 = vpop.permute.xlu0 %1813
        %1815 = vrot.lane.b32.xlu0 %v1516, 125
        %v1816 = vpop.permute.xlu0 %1815
        %vm1817 = vcmp.lt.s32.totalorder %v317, 125
        %v1818 = vsel %vm1817, %v1814, %v1816
        %v1819 = vsel %vm1817, %v1816, %v1814
        %v1821 = vperm.slane %v1812, 0
        %v1822 = vperm.slane %v1812, 1
        %v1825 = vmul.f32 %v1818, %v1821
        %v1826 = vmul.f32 %v1819, %v1822
        %s1827 = scalar_lea.vmem %s6, 40
        %v1828 = vld [vmem:[%s1827] sm:$0xff]
        %v1830 = vsel %vm995, %v1828, 0
        %1832 = vmatpush.msra.mxu0 0.0
        %1833 = vmatpush.msra.mxu0 0.0
        %1834 = vmatpush.msra.mxu0 0.0
        %1835 = vmatpush.msra.mxu0 0.0
        %1836 = vmatpush.msra.mxu0 0.0
        %1837 = vmatpush.msra.mxu0 0.0
        %1838 = vmatpush.msra.mxu0 0.0
        %1839 = vmatpush.msra.mxu0 0.0
        %1840 = vmatpush.msra.mxu0 0.0
        %1841 = vmatpush.msra.mxu0 0.0
        %1842 = vmatpush.msra.mxu0 0.0
        %1843 = vmatpush.msra.mxu0 0.0
        %1844 = vmatpush.msra.mxu0 0.0
        %1845 = vmatpush.msra.mxu0 0.0
        %1846 = vmatpush.msra.mxu0 0.0
        %1847 = vmatpush.msra.mxu0 %v1825
        %1848 = vmatmul.f32.gmra.mxu0 %v1830
        %v1849 = vpop.f32.mrf.mxu0
        %v1850 = vadd.f32 0.0, %v1849
        %1851 = vdwg.mxu0
        %1852 = vmatpush.msra.mxu0 0.0
        %1853 = vmatpush.msra.mxu0 0.0
        %1854 = vmatpush.msra.mxu0 0.0
        %1855 = vmatpush.msra.mxu0 0.0
        %1856 = vmatpush.msra.mxu0 0.0
        %1857 = vmatpush.msra.mxu0 0.0
        %1858 = vmatpush.msra.mxu0 0.0
        %1859 = vmatpush.msra.mxu0 0.0
        %1860 = vmatpush.msra.mxu0 0.0
        %1861 = vmatpush.msra.mxu0 0.0
        %1862 = vmatpush.msra.mxu0 0.0
        %1863 = vmatpush.msra.mxu0 0.0
        %1864 = vmatpush.msra.mxu0 0.0
        %1865 = vmatpush.msra.mxu0 0.0
        %1866 = vmatpush.msra.mxu0 0.0
        %1867 = vmatpush.msra.mxu0 %v1826
        %1868 = vmatmul.f32.gmra.mxu0 %v1830
        %v1869 = vpop.f32.mrf.mxu0
        %v1870 = vadd.f32 0.0, %v1869
        %1871 = vdwg.mxu0
        %v1872 = vadd.f32 %v1809, %v1850
        %v1873 = vadd.f32 %v1810, %v1870
        %s1874 = scalar_lea.vmem %s1, 48
        %v1875 = vld [vmem:[%s1874] ss:$8 sm:$0x3]
        %1876 = vrot.lane.b32.xlu0 %v1515, 83
        %v1877 = vpop.permute.xlu0 %1876
        %1878 = vrot.lane.b32.xlu0 %v1516, 83
        %v1879 = vpop.permute.xlu0 %1878
        %vm1880 = vcmp.lt.s32.totalorder %v317, 83
        %v1881 = vsel %vm1880, %v1877, %v1879
        %v1882 = vsel %vm1880, %v1879, %v1877
        %v1884 = vperm.slane %v1875, 0
        %v1885 = vperm.slane %v1875, 1
        %v1888 = vmul.f32 %v1881, %v1884
        %v1889 = vmul.f32 %v1882, %v1885
        %s1890 = scalar_lea.vmem %s6, 48
        %v1891 = vld [vmem:[%s1890] sm:$0xff]
        %v1893 = vsel %vm995, %v1891, 0
        %1895 = vmatpush.msra.mxu0 0.0
        %1896 = vmatpush.msra.mxu0 0.0
        %1897 = vmatpush.msra.mxu0 0.0
        %1898 = vmatpush.msra.mxu0 0.0
        %1899 = vmatpush.msra.mxu0 0.0
        %1900 = vmatpush.msra.mxu0 0.0
        %1901 = vmatpush.msra.mxu0 0.0
        %1902 = vmatpush.msra.mxu0 0.0
        %1903 = vmatpush.msra.mxu0 0.0
        %1904 = vmatpush.msra.mxu0 0.0
        %1905 = vmatpush.msra.mxu0 0.0
        %1906 = vmatpush.msra.mxu0 0.0
        %1907 = vmatpush.msra.mxu0 0.0
        %1908 = vmatpush.msra.mxu0 0.0
        %1909 = vmatpush.msra.mxu0 0.0
        %1910 = vmatpush.msra.mxu0 %v1888
        %1911 = vmatmul.f32.gmra.mxu0 %v1893
        %v1912 = vpop.f32.mrf.mxu0
        %v1913 = vadd.f32 0.0, %v1912
        %1914 = vdwg.mxu0
        %1915 = vmatpush.msra.mxu0 0.0
        %1916 = vmatpush.msra.mxu0 0.0
        %1917 = vmatpush.msra.mxu0 0.0
        %1918 = vmatpush.msra.mxu0 0.0
        %1919 = vmatpush.msra.mxu0 0.0
        %1920 = vmatpush.msra.mxu0 0.0
        %1921 = vmatpush.msra.mxu0 0.0
        %1922 = vmatpush.msra.mxu0 0.0
        %1923 = vmatpush.msra.mxu0 0.0
        %1924 = vmatpush.msra.mxu0 0.0
        %1925 = vmatpush.msra.mxu0 0.0
        %1926 = vmatpush.msra.mxu0 0.0
        %1927 = vmatpush.msra.mxu0 0.0
        %1928 = vmatpush.msra.mxu0 0.0
        %1929 = vmatpush.msra.mxu0 0.0
        %1930 = vmatpush.msra.mxu0 %v1889
        %1931 = vmatmul.f32.gmra.mxu0 %v1893
        %v1932 = vpop.f32.mrf.mxu0
        %v1933 = vadd.f32 0.0, %v1932
        %1934 = vdwg.mxu0
        %v1935 = vadd.f32 %v1872, %v1913
        %v1936 = vadd.f32 %v1873, %v1933
        %s1937 = scalar_lea.vmem %s1, 49
        %v1938 = vld [vmem:[%s1937] ss:$8 sm:$0x3]
        %1939 = vrot.lane.b32.xlu0 %v1515, 80
        %v1940 = vpop.permute.xlu0 %1939
        %1941 = vrot.lane.b32.xlu0 %v1516, 80
        %v1942 = vpop.permute.xlu0 %1941
        %vm1943 = vcmp.lt.s32.totalorder %v317, 80
        %v1944 = vsel %vm1943, %v1940, %v1942
        %v1945 = vsel %vm1943, %v1942, %v1940
        %v1947 = vperm.slane %v1938, 0
        %v1948 = vperm.slane %v1938, 1
        %v1951 = vmul.f32 %v1944, %v1947
        %v1952 = vmul.f32 %v1945, %v1948
        %s1953 = scalar_lea.vmem %s6, 56
        %v1954 = vld [vmem:[%s1953] sm:$0xff]
        %v1956 = vsel %vm995, %v1954, 0
        %1958 = vmatpush.msra.mxu0 0.0
        %1959 = vmatpush.msra.mxu0 0.0
        %1960 = vmatpush.msra.mxu0 0.0
        %1961 = vmatpush.msra.mxu0 0.0
        %1962 = vmatpush.msra.mxu0 0.0
        %1963 = vmatpush.msra.mxu0 0.0
        %1964 = vmatpush.msra.mxu0 0.0
        %1965 = vmatpush.msra.mxu0 0.0
        %1966 = vmatpush.msra.mxu0 0.0
        %1967 = vmatpush.msra.mxu0 0.0
        %1968 = vmatpush.msra.mxu0 0.0
        %1969 = vmatpush.msra.mxu0 0.0
        %1970 = vmatpush.msra.mxu0 0.0
        %1971 = vmatpush.msra.mxu0 0.0
        %1972 = vmatpush.msra.mxu0 0.0
        %1973 = vmatpush.msra.mxu0 %v1951
        %1974 = vmatmul.f32.gmra.mxu0 %v1956
        %v1975 = vpop.f32.mrf.mxu0
        %v1976 = vadd.f32 0.0, %v1975
        %1977 = vdwg.mxu0
        %1978 = vmatpush.msra.mxu0 0.0
        %1979 = vmatpush.msra.mxu0 0.0
        %1980 = vmatpush.msra.mxu0 0.0
        %1981 = vmatpush.msra.mxu0 0.0
        %1982 = vmatpush.msra.mxu0 0.0
        %1983 = vmatpush.msra.mxu0 0.0
        %1984 = vmatpush.msra.mxu0 0.0
        %1985 = vmatpush.msra.mxu0 0.0
        %1986 = vmatpush.msra.mxu0 0.0
        %1987 = vmatpush.msra.mxu0 0.0
        %1988 = vmatpush.msra.mxu0 0.0
        %1989 = vmatpush.msra.mxu0 0.0
        %1990 = vmatpush.msra.mxu0 0.0
        %1991 = vmatpush.msra.mxu0 0.0
        %1992 = vmatpush.msra.mxu0 0.0
        %1993 = vmatpush.msra.mxu0 %v1952
        %1994 = vmatmul.f32.gmra.mxu0 %v1956
        %v1995 = vpop.f32.mrf.mxu0
        %v1996 = vadd.f32 0.0, %v1995
        %1997 = vdwg.mxu0
        %v1998 = vadd.f32 %v1935, %v1976
        %v1999 = vadd.f32 %v1936, %v1996
        %s2000 = scalar_lea.vmem %s1, 50
        %v2001 = vld [vmem:[%s2000] ss:$8 sm:$0x3]
        %2002 = vrot.lane.b32.xlu0 %v1515, 77
        %v2003 = vpop.permute.xlu0 %2002
        %2004 = vrot.lane.b32.xlu0 %v1516, 77
        %v2005 = vpop.permute.xlu0 %2004
        %vm2006 = vcmp.lt.s32.totalorder %v317, 77
        %v2007 = vsel %vm2006, %v2003, %v2005
        %v2008 = vsel %vm2006, %v2005, %v2003
        %v2010 = vperm.slane %v2001, 0
        %v2011 = vperm.slane %v2001, 1
        %v2014 = vmul.f32 %v2007, %v2010
        %v2015 = vmul.f32 %v2008, %v2011
        %s2016 = scalar_lea.vmem %s6, 64
        %v2017 = vld [vmem:[%s2016] sm:$0xff]
        %v2019 = vsel %vm995, %v2017, 0
        %2021 = vmatpush.msra.mxu0 0.0
        %2022 = vmatpush.msra.mxu0 0.0
        %2023 = vmatpush.msra.mxu0 0.0
        %2024 = vmatpush.msra.mxu0 0.0
        %2025 = vmatpush.msra.mxu0 0.0
        %2026 = vmatpush.msra.mxu0 0.0
        %2027 = vmatpush.msra.mxu0 0.0
        %2028 = vmatpush.msra.mxu0 0.0
        %2029 = vmatpush.msra.mxu0 0.0
        %2030 = vmatpush.msra.mxu0 0.0
        %2031 = vmatpush.msra.mxu0 0.0
        %2032 = vmatpush.msra.mxu0 0.0
        %2033 = vmatpush.msra.mxu0 0.0
        %2034 = vmatpush.msra.mxu0 0.0
        %2035 = vmatpush.msra.mxu0 0.0
        %2036 = vmatpush.msra.mxu0 %v2014
        %2037 = vmatmul.f32.gmra.mxu0 %v2019
        %v2038 = vpop.f32.mrf.mxu0
        %v2039 = vadd.f32 0.0, %v2038
        %2040 = vdwg.mxu0
        %2041 = vmatpush.msra.mxu0 0.0
        %2042 = vmatpush.msra.mxu0 0.0
        %2043 = vmatpush.msra.mxu0 0.0
        %2044 = vmatpush.msra.mxu0 0.0
        %2045 = vmatpush.msra.mxu0 0.0
        %2046 = vmatpush.msra.mxu0 0.0
        %2047 = vmatpush.msra.mxu0 0.0
        %2048 = vmatpush.msra.mxu0 0.0
        %2049 = vmatpush.msra.mxu0 0.0
        %2050 = vmatpush.msra.mxu0 0.0
        %2051 = vmatpush.msra.mxu0 0.0
        %2052 = vmatpush.msra.mxu0 0.0
        %2053 = vmatpush.msra.mxu0 0.0
        %2054 = vmatpush.msra.mxu0 0.0
        %2055 = vmatpush.msra.mxu0 0.0
        %2056 = vmatpush.msra.mxu0 %v2015
        %2057 = vmatmul.f32.gmra.mxu0 %v2019
        %v2058 = vpop.f32.mrf.mxu0
        %v2059 = vadd.f32 0.0, %v2058
        %2060 = vdwg.mxu0
        %v2061 = vadd.f32 %v1998, %v2039
        %v2062 = vadd.f32 %v1999, %v2059
        %v2063 = vld [vmem:[%s7] sm:$0xff]
        %2065 = vset.pattern.permute.xlu0 0
        %2066 = vperm.xlu0 %2065, %v2063
        %v2067 = vpop.permute.xlu0 %2066
        %v2069 = vadd.f32 %v2061, %v2067
        %v2070 = vadd.f32 %v2062, %v2067
        %v2071 = vmax.f32 %v2069, 0.0
        %v2072 = vmax.f32 %v2070, 0.0
        %2073 = vst [vmem:[%s298] sm:$0xff] %v2071
        %2074 = vst [vmem:[%s298 + $0x8] sm:$0xff] %v2072
        %s2075 = sand.u32 %s203, 1
        %s2076 = scalar_lea.sflag [#allocation3], %s2075
        %s2077 = sand.u32 %s203, 1
        %s2078 = smul.addr %s2077, 16
        %s2079 = scalar_lea.vmem [#allocation2], %s2078
        // Predicated region
        $region53: #{tpu_custom_call.1} parent=51 // pred_check
          %p2080 = pneg %p213
        $region54: #{tpu_custom_call.1} parent=51 // pred_check_branch
          %2082 = sbr.rel (%p2080) target = $region56
        $region55: #{tpu_custom_call.1} parent=51 // pred_region
          %2084 = vsyncadd %s2076, 0
          %s2085 = smul.addr %s22, 2
          %s2086 = smul.addr %s2085, 8
          %s2087 = scalar_lea.hbm %s8, %s2086
          %s2089 = sshll.u32 %s2079, 4
          %s2090 = int_to_ptr.vmem [resolvable:$true] %s2089
          %s2091 = sshll.u32 %s2087, 4
          %s2092 = int_to_ptr.hbm [resolvable:$true] %s2091
          %2094 = dma.vmem_to_hbm [thread:$0]  %s2090, 256, %s2092, %s2076
        $region56: #{tpu_custom_call.1} parent=51 // pred_fallthru
          _
      $region52: #{tpu_custom_call.1} parent=5 // pred_fallthru
        _
      %p2095 = scmp.le.s32.totalorder 2, %s17
      // Predicated region
      $region57: #{tpu_custom_call.1} parent=5 // pred_check
        %p2096 = pneg %p2095
      $region58: #{tpu_custom_call.1} parent=5 // pred_check_branch
        %2098 = sbr.rel (%p2096) target = $region60
      $region59: #{tpu_custom_call.1} parent=5 // pred_region
        %s2099 = ssub.s32 %s17, 2
        // Predicated region
        $region61: #{tpu_custom_call.1} parent=59 // pred_check
          %p2100 = pneg %p219
        $region62: #{tpu_custom_call.1} parent=59 // pred_check_branch
          %2102 = sbr.rel (%p2100) target = $region64
        $region63: #{tpu_custom_call.1} parent=59 // pred_region
          %s2103 = sand.u32 %s204, 1
          %s2104 = scalar_lea.sflag [#allocation3], %s2103
          %s2105 = sand.u32 %s204, 1
          %s2106 = smul.addr %s2105, 16
          %s2107 = scalar_lea.vmem [#allocation2], %s2106
          %2109 = dma.done %s2104, 256
        $region64: #{tpu_custom_call.1} parent=59 // pred_fallthru
          _
      $region60: #{tpu_custom_call.1} parent=5 // pred_fallthru
        _
    $region6: #{tpu_custom_call.1} parent=1 // loop_footer
      %s21 = sadd.s32 1, %s17
    $region7: #{tpu_custom_call.1} parent=1 // loop_footer_branch
      %16 = sbr.rel target = $region3
    $region8: #{tpu_custom_call.1} parent=1 // loop_exit
      _
    %2110 = vsyncpa [#allocation3], 1
    %s2111 = scalar_lea.sflag [#allocation3], 1
    %2112 = vsyncpa %s2111, 1

</llo_original>
